<compile_context>
chip_gen: v7x
topology: tpu7x:2x2x1
jax: 0.10.0
libtpu: 0.0.40
codegen_flags: <defaults>
</compile_context>

<pallas_src>
import functools
import math

import jax
import jax.numpy as jnp
import numpy as np
from jax.experimental import pallas as pl
from jax.experimental.pallas import tpu as pltpu


# ---------------------------------------------------------------------------
# Fused kernel: QKV projection + batched multi-head softmax attention +
# output projection. No grid — everything lives in VMEM for the whole call.
# ---------------------------------------------------------------------------
def _mha_fused_kernel(x_ref, p_ref, o_ref, *, B, S, H, dh,
                      bqkv_row, wo_row, bo_row):
    F = x_ref.shape[1]
    D = H * dh
    BS = B * S

    # Static, 8-aligned slices out of the single packed parameter slab.
    wqkv = p_ref[0:F, :]                       # (F, 3D)   [scale*Wq^T|Wk^T|Wv^T]
    bqkv = p_ref[bqkv_row:bqkv_row + 1, :]     # (1, 3D)   [scale*bq | bk | bv]
    wo = p_ref[wo_row:wo_row + D, 0:D]         # (D, D)    Wo^T (in, out)
    bo = p_ref[bo_row:bo_row + 1, 0:D]         # (1, D)

    # Fused QKV projection: one (B*S, F) x (F, 3D) matmul, bias broadcast-add.
    x2 = x_ref[...]                                                   # (BS, F)
    qkv = jnp.dot(x2, wqkv, preferred_element_type=jnp.float32) + bqkv  # (BS, 3D)

    # Head split -> (H*B, S, dh), head-major (matches torch permute(2,0,1,3)).
    def split(base):
        parts = [qkv[:, base + h * dh: base + (h + 1) * dh].reshape(B, S, dh)
                 for h in range(H)]
        return jnp.concatenate(parts, axis=0)                         # (H*B, S, dh)

    q = split(0)          # already pre-scaled by 1/sqrt(dh) via the packed Wq
    k = split(D)
    v = split(2 * D)

    # One batched score matmul, one softmax, one batched PV matmul.
    s = jnp.einsum("nqd,nkd->nqk", q, k,
                   preferred_element_type=jnp.float32)                # (H*B, S, S)
    m = jnp.max(s, axis=-1, keepdims=True)
    e = jnp.exp(s - m)
    p = e / jnp.sum(e, axis=-1, keepdims=True)                        # exact softmax
    o = jnp.einsum("nqk,nkd->nqd", p, v,
                   preferred_element_type=jnp.float32)                # (H*B, S, dh)

    # Re-assemble heads on lanes: (H*B, S, dh) -> (B*S, D), then ONE K=D
    # output-projection matmul.
    heads = [o[h * B:(h + 1) * B].reshape(BS, dh) for h in range(H)]
    y = jnp.concatenate(heads, axis=1)                                # (BS, D)
    o_ref[...] = (jnp.dot(y, wo, preferred_element_type=jnp.float32) + bo
                  ).astype(o_ref.dtype)


def multi_head_attention(x, params, *, num_heads):
    """Pallas implementation of the PyTorch MultiHeadAttention.forward."""
    wq, bq, wk, bk, wv, bv, wo, bo = params
    B, S, F = x.shape
    D = wq.shape[0]
    dh = D // num_heads
    scale = 1.0 / math.sqrt(dh)

    def round_up(a, m):
        return (a + m - 1) // m * m

    # --- Host-side packing: ONE zero-padded parameter slab (layout plumbing).
    # Row layout (section starts 8-aligned so in-kernel slices are cheap):
    #   [0:F)               fused QKV weight  [scale*Wq^T | Wk^T | Wv^T]  (F, 3D)
    #   [bqkv_row]          fused QKV bias    [scale*bq | bk | bv]        (1, 3D)
    #   [wo_row:wo_row+D)   Wo^T in cols [0:D)                            (D, D)
    #   [bo_row]            bo   in cols [0:D)                            (1, D)
    bqkv_row = round_up(F, 8)
    wo_row = bqkv_row + 8
    bo_row = wo_row + D
    n_rows = round_up(bo_row + 1, 8)

    wqkv = jnp.concatenate([wq.T * scale, wk.T, wv.T], axis=1)        # (F, 3D)
    bqkv = jnp.concatenate([bq * scale, bk, bv])                      # (3D,)
    slab = jnp.zeros((n_rows, 3 * D), jnp.float32)
    slab = slab.at[0:F, :].set(wqkv)
    slab = slab.at[bqkv_row, :].set(bqkv)
    slab = slab.at[wo_row:wo_row + D, 0:D].set(wo.T)
    slab = slab.at[bo_row, 0:D].set(bo)

    # B*S flattening done in the wrapper (free XLA metadata), not in-kernel.
    x2 = x.reshape(B * S, F).astype(jnp.float32)

    kernel = functools.partial(_mha_fused_kernel, B=B, S=S, H=num_heads, dh=dh,
                               bqkv_row=bqkv_row, wo_row=wo_row, bo_row=bo_row)
    out2 = pl.pallas_call(
        kernel,
        out_shape=jax.ShapeDtypeStruct((B * S, D), jnp.float32),
        # No grid: single invocation, full arrays resident in VMEM.
        in_specs=[
            pl.BlockSpec(memory_space=pltpu.MemorySpace.VMEM),   # x (B*S, F)
            pl.BlockSpec(memory_space=pltpu.MemorySpace.VMEM),   # param slab
        ],
        out_specs=pl.BlockSpec(memory_space=pltpu.MemorySpace.VMEM),
    )(x2, slab)
    return out2.reshape(B, S, D)


# ---------------------------------------------------------------------------
# Pure-JAX reference (mirrors the PyTorch forward, float32, exact softmax).
# ---------------------------------------------------------------------------
def reference(x, params, num_heads):
    wq, bq, wk, bk, wv, bv, wo, bo = params
    B, S, F = x.shape
    D = wq.shape[0]
    dh = D // num_heads

    def split_heads(y):  # (B,S,D) -> (H*B, S, dh) matching torch permute(2,0,1,3)
        return y.reshape(B, S, num_heads, dh).transpose(2, 0, 1, 3).reshape(-1, S, dh)

    q = split_heads(x @ wq.T + bq)
    k = split_heads(x @ wk.T + bk)
    v = split_heads(x @ wv.T + bv)
    s = jnp.einsum("nqd,nkd->nqk", q, k) / math.sqrt(dh)
    p = jax.nn.softmax(s, axis=-1)
    o = jnp.einsum("nqk,nkd->nqd", p, v)
    o = o.reshape(num_heads, B, S, dh).transpose(1, 2, 0, 3).reshape(B, S, D)
    return o @ wo.T + bo


def init_params(key, in_dim, feat=25):
    """Deterministic PyTorch-Linear-style init: U(-1/sqrt(fan_in), 1/sqrt(fan_in))."""
    keys = jax.random.split(key, 8)

    def lin(kw, kb, fan_in, fan_out):
        bound = 1.0 / math.sqrt(fan_in)
        w = jax.random.uniform(kw, (fan_out, fan_in), jnp.float32, -bound, bound)
        b = jax.random.uniform(kb, (fan_out,), jnp.float32, -bound, bound)
        return w, b

    wq, bq = lin(keys[0], keys[1], feat, in_dim)
    wk, bk = lin(keys[2], keys[3], feat, in_dim)
    wv, bv = lin(keys[4], keys[5], feat, in_dim)
    wo, bo = lin(keys[6], keys[7], in_dim, in_dim)
    return (wq, bq, wk, bk, wv, bv, wo, bo)


if __name__ == "__main__":
    batch, seq_len, feat = 2, 8, 25
    in_dim, num_heads = 32, 4

    key = jax.random.PRNGKey(0)
    kx, kp = jax.random.split(key)
    x = jax.random.normal(kx, (batch, seq_len, feat), dtype=jnp.float32)
    params = init_params(kp, in_dim, feat)

    mha = jax.jit(functools.partial(multi_head_attention, num_heads=num_heads))
    out = jax.block_until_ready(mha(x, params))

    ref = reference(x, params, num_heads)
    assert out.shape == (batch, seq_len, in_dim), out.shape
    # 1e-3 tolerance: float32 math (vs the module's float64) and default-
    # precision reference matmuls; the kernel softmax itself is exact.
    np.testing.assert_allclose(np.asarray(out), np.asarray(ref),
                               rtol=1e-3, atol=1e-3)

    print("KERNEL_OK")
</pallas_src>

<mosaic_0001>
module attributes {stable_mosaic.version = 11 : i64} {
  func.func @_mha_fused_kernel(%arg0: memref<16x25xf32, #tpu.memory_space<vmem>>, %arg1: memref<80x96xf32, #tpu.memory_space<vmem>>, %arg2: memref<16x32xf32, #tpu.memory_space<vmem>>) attributes {dimension_semantics = [], scalar_prefetch = 0 : i64, scratch_operands = 0 : i64, tpu.core_type = #tpu.core_type<tc>} {
    %c0 = arith.constant 0 : index
    %c0_0 = arith.constant 0 : index
    %0 = vector.load %arg1[%c0, %c0_0] : memref<80x96xf32, #tpu.memory_space<vmem>>, vector<25x96xf32>
    %c32 = arith.constant 32 : index
    %c0_1 = arith.constant 0 : index
    %1 = vector.load %arg1[%c32, %c0_1] : memref<80x96xf32, #tpu.memory_space<vmem>>, vector<1x96xf32>
    %c40 = arith.constant 40 : index
    %c0_2 = arith.constant 0 : index
    %2 = vector.load %arg1[%c40, %c0_2] : memref<80x96xf32, #tpu.memory_space<vmem>>, vector<32x32xf32>
    %c72 = arith.constant 72 : index
    %c0_3 = arith.constant 0 : index
    %3 = vector.load %arg1[%c72, %c0_3] : memref<80x96xf32, #tpu.memory_space<vmem>>, vector<1x32xf32>
    %c0_4 = arith.constant 0 : index
    %c0_5 = arith.constant 0 : index
    %4 = vector.load %arg0[%c0_4, %c0_5] : memref<16x25xf32, #tpu.memory_space<vmem>>, vector<16x25xf32>
    %cst = arith.constant dense<0.000000e+00> : vector<16x96xf32>
    %5 = tpu.matmul %4, %0, %cst {dimension_numbers = #tpu.dot_dimension_numbers<[1], [0], [0], [1], [0, 0, 1, 1], [], []>} : vector<16x25xf32>, vector<25x96xf32>, vector<16x96xf32> -> vector<16x96xf32>
    %6 = vector.broadcast %1 : vector<1x96xf32> to vector<16x96xf32>
    %7 = arith.addf %5, %6 : vector<16x96xf32>
    %8 = vector.extract_strided_slice %7 {offsets = [0, 0], sizes = [16, 8], strides = [1, 1]} : vector<16x96xf32> to vector<16x8xf32>
    %9 = vector.shape_cast %8 : vector<16x8xf32> to vector<2x8x8xf32>
    %10 = vector.extract_strided_slice %7 {offsets = [0, 8], sizes = [16, 8], strides = [1, 1]} : vector<16x96xf32> to vector<16x8xf32>
    %11 = vector.shape_cast %10 : vector<16x8xf32> to vector<2x8x8xf32>
    %12 = vector.extract_strided_slice %7 {offsets = [0, 16], sizes = [16, 8], strides = [1, 1]} : vector<16x96xf32> to vector<16x8xf32>
    %13 = vector.shape_cast %12 : vector<16x8xf32> to vector<2x8x8xf32>
    %14 = vector.extract_strided_slice %7 {offsets = [0, 24], sizes = [16, 8], strides = [1, 1]} : vector<16x96xf32> to vector<16x8xf32>
    %15 = vector.shape_cast %14 : vector<16x8xf32> to vector<2x8x8xf32>
    %16 = tpu.concatenate %9, %11, %13, %15 in 0 : vector<2x8x8xf32>, vector<2x8x8xf32>, vector<2x8x8xf32>, vector<2x8x8xf32> -> vector<8x8x8xf32>
    %17 = vector.extract_strided_slice %7 {offsets = [0, 32], sizes = [16, 8], strides = [1, 1]} : vector<16x96xf32> to vector<16x8xf32>
    %18 = vector.shape_cast %17 : vector<16x8xf32> to vector<2x8x8xf32>
    %19 = vector.extract_strided_slice %7 {offsets = [0, 40], sizes = [16, 8], strides = [1, 1]} : vector<16x96xf32> to vector<16x8xf32>
    %20 = vector.shape_cast %19 : vector<16x8xf32> to vector<2x8x8xf32>
    %21 = vector.extract_strided_slice %7 {offsets = [0, 48], sizes = [16, 8], strides = [1, 1]} : vector<16x96xf32> to vector<16x8xf32>
    %22 = vector.shape_cast %21 : vector<16x8xf32> to vector<2x8x8xf32>
    %23 = vector.extract_strided_slice %7 {offsets = [0, 56], sizes = [16, 8], strides = [1, 1]} : vector<16x96xf32> to vector<16x8xf32>
    %24 = vector.shape_cast %23 : vector<16x8xf32> to vector<2x8x8xf32>
    %25 = tpu.concatenate %18, %20, %22, %24 in 0 : vector<2x8x8xf32>, vector<2x8x8xf32>, vector<2x8x8xf32>, vector<2x8x8xf32> -> vector<8x8x8xf32>
    %26 = vector.extract_strided_slice %7 {offsets = [0, 64], sizes = [16, 8], strides = [1, 1]} : vector<16x96xf32> to vector<16x8xf32>
    %27 = vector.shape_cast %26 : vector<16x8xf32> to vector<2x8x8xf32>
    %28 = vector.extract_strided_slice %7 {offsets = [0, 72], sizes = [16, 8], strides = [1, 1]} : vector<16x96xf32> to vector<16x8xf32>
    %29 = vector.shape_cast %28 : vector<16x8xf32> to vector<2x8x8xf32>
    %30 = vector.extract_strided_slice %7 {offsets = [0, 80], sizes = [16, 8], strides = [1, 1]} : vector<16x96xf32> to vector<16x8xf32>
    %31 = vector.shape_cast %30 : vector<16x8xf32> to vector<2x8x8xf32>
    %32 = vector.extract_strided_slice %7 {offsets = [0, 88], sizes = [16, 8], strides = [1, 1]} : vector<16x96xf32> to vector<16x8xf32>
    %33 = vector.shape_cast %32 : vector<16x8xf32> to vector<2x8x8xf32>
    %34 = tpu.concatenate %27, %29, %31, %33 in 0 : vector<2x8x8xf32>, vector<2x8x8xf32>, vector<2x8x8xf32>, vector<2x8x8xf32> -> vector<8x8x8xf32>
    "tpu.trace_start"() <{level = 10 : i32, message = "nqd,nkd->nqk"}> : () -> ()
    %cst_6 = arith.constant dense<0.000000e+00> : vector<8x8x8xf32>
    %35 = tpu.matmul %16, %25, %cst_6 {dimension_numbers = #tpu.dot_dimension_numbers<[2], [2], [1], [1], [0, 0, 0, 1, 1, 1], [0], [0]>} : vector<8x8x8xf32>, vector<8x8x8xf32>, vector<8x8x8xf32> -> vector<8x8x8xf32>
    "tpu.trace_stop"() : () -> ()
    %cst_7 = arith.constant dense<0xFF800000> : vector<8x8xf32>
    %36 = vector.multi_reduction <maximumf>, %35, %cst_7 [2] : vector<8x8x8xf32> to vector<8x8xf32>
    %37 = vector.shape_cast %36 : vector<8x8xf32> to vector<8x8x1xf32>
    %38 = vector.broadcast %37 : vector<8x8x1xf32> to vector<8x8x8xf32>
    %39 = arith.subf %35, %38 : vector<8x8x8xf32>
    %40 = math.exp %39 : vector<8x8x8xf32>
    %cst_8 = arith.constant dense<0.000000e+00> : vector<8x8xf32>
    %41 = vector.multi_reduction <add>, %40, %cst_8 [2] : vector<8x8x8xf32> to vector<8x8xf32>
    %42 = vector.shape_cast %41 : vector<8x8xf32> to vector<8x8x1xf32>
    %43 = vector.broadcast %42 : vector<8x8x1xf32> to vector<8x8x8xf32>
    %44 = arith.divf %40, %43 : vector<8x8x8xf32>
    "tpu.trace_start"() <{level = 10 : i32, message = "nqk,nkd->nqd"}> : () -> ()
    %cst_9 = arith.constant dense<0.000000e+00> : vector<8x8x8xf32>
    %45 = tpu.matmul %44, %34, %cst_9 {dimension_numbers = #tpu.dot_dimension_numbers<[2], [1], [1], [2], [0, 0, 0, 1, 1, 2], [0], [0]>} : vector<8x8x8xf32>, vector<8x8x8xf32>, vector<8x8x8xf32> -> vector<8x8x8xf32>
    "tpu.trace_stop"() : () -> ()
    %46 = vector.extract_strided_slice %45 {offsets = [0, 0, 0], sizes = [2, 8, 8], strides = [1, 1, 1]} : vector<8x8x8xf32> to vector<2x8x8xf32>
    %47 = vector.shape_cast %46 : vector<2x8x8xf32> to vector<16x8xf32>
    %48 = vector.extract_strided_slice %45 {offsets = [2, 0, 0], sizes = [2, 8, 8], strides = [1, 1, 1]} : vector<8x8x8xf32> to vector<2x8x8xf32>
    %49 = vector.shape_cast %48 : vector<2x8x8xf32> to vector<16x8xf32>
    %50 = vector.extract_strided_slice %45 {offsets = [4, 0, 0], sizes = [2, 8, 8], strides = [1, 1, 1]} : vector<8x8x8xf32> to vector<2x8x8xf32>
    %51 = vector.shape_cast %50 : vector<2x8x8xf32> to vector<16x8xf32>
    %52 = vector.extract_strided_slice %45 {offsets = [6, 0, 0], sizes = [2, 8, 8], strides = [1, 1, 1]} : vector<8x8x8xf32> to vector<2x8x8xf32>
    %53 = vector.shape_cast %52 : vector<2x8x8xf32> to vector<16x8xf32>
    %54 = tpu.concatenate %47, %49, %51, %53 in 1 : vector<16x8xf32>, vector<16x8xf32>, vector<16x8xf32>, vector<16x8xf32> -> vector<16x32xf32>
    %cst_10 = arith.constant dense<0.000000e+00> : vector<16x32xf32>
    %55 = tpu.matmul %54, %2, %cst_10 {dimension_numbers = #tpu.dot_dimension_numbers<[1], [0], [0], [1], [0, 0, 1, 1], [], []>} : vector<16x32xf32>, vector<32x32xf32>, vector<16x32xf32> -> vector<16x32xf32>
    %56 = vector.broadcast %3 : vector<1x32xf32> to vector<16x32xf32>
    %57 = arith.addf %55, %56 : vector<16x32xf32>
    %c0_11 = arith.constant 0 : index
    %c0_12 = arith.constant 0 : index
    %58 = vector.load %arg2[%c0_11, %c0_12] : memref<16x32xf32, #tpu.memory_space<vmem>>, vector<16x32xf32>
    tpu.vector_store %arg2[%c0_11, %c0_12], %57 {strides = array<i32>} : memref<16x32xf32, #tpu.memory_space<vmem>>, vector<16x32xf32>,
    return
  }
}

</mosaic_0001>

<llo_original>
// kernel: multi_head_attention.1
$region0: #{multi_head_attention.1}
  #allocation0 [shape = 'u32[]', space=smem, size = 0x4, offset = 0x4, fixed_abs, tag = 'smem constant byte address 0x4 - core index']
  #allocation1 [shape = 'u32[144,128]{1,0:T(1,128)}', space=vmem, size = 0x12000, scoped, tag = 'internal scratch']
  %s0 = inlined_call_operand.vmem [shape: f32[16,25], index: 0, kind: input, shape index: {}]
  %s1 = inlined_call_operand.vmem [shape: f32[80,96], index: 1, kind: input, shape index: {}]
  %s2 = inlined_call_operand.hbm [shape: f32[16,32], index: 2, kind: output, shape index: {}]
  %s3 = sld [smem:[#allocation0]]
  $region18: #{multi_head_attention.1} parent=0
    _
  %s5 = ssub.s32 1, %s3
  %s6 = scalar_select 0, %s5, %s3
  $region1: #{multi_head_attention.1} parent=0
    #allocation2 [shape = 'u8[8192]{0}', space=vmem, size = 0x2000, scoped, tag = 'output window, operand 0, single buffered']
    #allocation3 [shape = 's32[1]{0}', space=sflag, size = 0x4, scoped, tag = 'scoped memory for multi_head_attention.1']
    %7 = vsyncpa [#allocation3], 0
    // Predicated region
    $region2: #{multi_head_attention.1} parent=1 // pred_check
      _
    $region3: #{multi_head_attention.1} parent=1 // pred_check_branch
      %9 = sbr.rel (0) target = $region5
    $region4: #{multi_head_attention.1} parent=1 // pred_region
      _
    $region5: #{multi_head_attention.1} parent=1 // pred_fallthru
      _
    // Predicated region
    $region6: #{multi_head_attention.1} parent=1 // pred_check
      _
    $region7: #{multi_head_attention.1} parent=1 // pred_check_branch
      %11 = sbr.rel (0) target = $region9
    $region8: #{multi_head_attention.1} parent=1 // pred_region
      _
    $region9: #{multi_head_attention.1} parent=1 // pred_fallthru
      _
    %v12 = vld [vmem:[%s1] sm:$0xff]
    %v13 = vld [vmem:[%s1 + $0x8] sm:$0xff]
    %v14 = vld [vmem:[%s1 + $0x10] sm:$0xff]
    %v15 = vld [vmem:[%s1 + $0x18] sm:$0x1]
    %v16 = vld [vmem:[%s1 + $0x20] sm:$0x1]
    %v17 = vld [vmem:[%s1 + $0x28] sm:$0xff]
    %v18 = vld [vmem:[%s1 + $0x30] sm:$0xff]
    %v19 = vld [vmem:[%s1 + $0x38] sm:$0xff]
    %v20 = vld [vmem:[%s1 + $0x40] sm:$0xff]
    %v21 = vld [vmem:[%s1 + $0x48] sm:$0x1]
    %v22 = vld [vmem:[%s0] sm:$0xff]
    %v23 = vld [vmem:[%s0 + $0x8] sm:$0xff]
    %v24 = vlaneseq
    %v25 = vshrl.u32 %v24, 7
    %v26 = vsub.s32 0, %v25
    %v27 = vrot.slane %v16, %v26
    %vm28 = vcmask 203776
    %v30 = vsel %vm28, %v22, 0
    %v33 = vsel %vm28, %v23, 0
    %vm35 = vcmask 1040384
    %v37 = vsel %vm35, %v15, 0
    %39 = vmatprep.subr.mxu0 0.0
    %40 = vmatpush1.msra.mxu0 %v12
    %41 = vmatprep.subr.mxu0 0.0
    %42 = vmatpush1.msra.mxu0 %v13
    %43 = vmatprep.subr.mxu0 0.0
    %44 = vmatpush1.msra.mxu0 %v14
    %45 = vmatprep.subr.mxu0 0.0
    %46 = vmatpush1.msra.mxu0 %v37
    %47 = vmatprep.subr.mxu0 0.0
    %48 = vmatpush1.msra.mxu0 0.0
    %49 = vmatprep.subr.mxu0 0.0
    %50 = vmatpush1.msra.mxu0 0.0
    %51 = vmatprep.subr.mxu0 0.0
    %52 = vmatpush1.msra.mxu0 0.0
    %53 = vmatprep.subr.mxu0 0.0
    %54 = vmatpush1.msra.mxu0 0.0
    %55 = vmatprep.subr.mxu0 0.0
    %56 = vmatpush1.msra.mxu0 0.0
    %57 = vmatprep.subr.mxu0 0.0
    %58 = vmatpush1.msra.mxu0 0.0
    %59 = vmatprep.subr.mxu0 0.0
    %60 = vmatpush1.msra.mxu0 0.0
    %61 = vmatprep.subr.mxu0 0.0
    %62 = vmatpush1.msra.mxu0 0.0
    %63 = vmatprep.subr.mxu0 0.0
    %64 = vmatpush1.msra.mxu0 0.0
    %65 = vmatprep.subr.mxu0 0.0
    %66 = vmatpush1.msra.mxu0 0.0
    %67 = vmatprep.subr.mxu0 0.0
    %68 = vmatpush1.msra.mxu0 0.0
    %69 = vmatprep.subr.mxu0 0.0
    %70 = vmatpush1.msra.mxu0 0.0
    %71 = vmatprep.subr.mxu0 0.0
    %72 = vmatpush1.msra.mxu0 0.0
    %73 = vmatprep.subr.mxu0 0.0
    %74 = vmatpush1.msra.mxu0 0.0
    %75 = vmatprep.subr.mxu0 0.0
    %76 = vmatpush1.msra.mxu0 0.0
    %77 = vmatprep.subr.mxu0 0.0
    %78 = vmatpush1.msra.mxu0 0.0
    %79 = vmatprep.subr.mxu0 0.0
    %80 = vmatpush1.msra.mxu0 0.0
    %81 = vmatprep.subr.mxu0 0.0
    %82 = vmatpush1.msra.mxu0 0.0
    %83 = vmatprep.subr.mxu0 0.0
    %84 = vmatpush1.msra.mxu0 0.0
    %85 = vmatprep.subr.mxu0 0.0
    %86 = vmatpush1.msra.mxu0 0.0
    %87 = vmatprep.subr.mxu0 0.0
    %88 = vmatpush1.msra.mxu0 0.0
    %89 = vmatprep.subr.mxu0 0.0
    %90 = vmatpush1.msra.mxu0 0.0
    %91 = vmatprep.subr.mxu0 0.0
    %92 = vmatpush1.msra.mxu0 0.0
    %93 = vmatprep.subr.mxu0 0.0
    %94 = vmatpush1.msra.mxu0 0.0
    %95 = vmatprep.subr.mxu0 0.0
    %96 = vmatpush1.msra.mxu0 0.0
    %97 = vmatprep.subr.mxu0 0.0
    %98 = vmatpush1.msra.mxu0 0.0
    %99 = vmatprep.subr.mxu0 0.0
    %100 = vmatpush1.msra.mxu0 0.0
    %101 = vmatprep.subr.mxu0 0.0
    %102 = vmatpush1.msra.mxu0 0.0
    %103 = vmatprep.mubr.f32.mxu0 0.0
    %104 = vmatmul.mubr.f32.gmra.mrb[0].mxu0 %v30
    %v105 = vpop.f32.mrb[0].mxu0
    %v106 = vadd.f32 %v27, %v105
    %v107 = vpop.f32.mrb[0].mxu0
    %108 = vmatprep.mubr.f32.mxu0 0.0
    %109 = vmatmul.mubr.f32.gmra.mrb[0].mxu0 %v33
    %v110 = vpop.f32.mrb[0].mxu0
    %v111 = vadd.f32 %v27, %v110
    %v112 = vpop.f32.mrb[0].mxu0
    %113 = vdwg.mxu0
    %116 = vrot.lane.b32.xlu0 %v106, 120
    %v117 = vpop.permute.xlu0 %116
    %118 = vrot.lane.b32.xlu0 %v111, 120
    %v119 = vpop.permute.xlu0 %118
    %120 = vrot.lane.b32.xlu0 %v106, 112
    %v121 = vpop.permute.xlu0 %120
    %122 = vrot.lane.b32.xlu0 %v111, 112
    %v123 = vpop.permute.xlu0 %122
    %124 = vrot.lane.b32.xlu0 %v106, 104
    %v125 = vpop.permute.xlu0 %124
    %126 = vrot.lane.b32.xlu0 %v111, 104
    %v127 = vpop.permute.xlu0 %126
    %128 = vrot.lane.b32.xlu0 %v106, 96
    %v129 = vpop.permute.xlu0 %128
    %vm130 = vcmask 64512
    %v131 = vsel %vm130, %v106, 0
    %v133 = vsel %vm130, %v129, 0
    %135 = vmatprep.subr.mxu0 0.0
    %136 = vmatpush1.xpose.msra.mxu0 %v133
    %137 = vmatprep.subr.mxu0 0.0
    %138 = vmatpush1.xpose.msra.mxu0 0.0
    %139 = vmatprep.subr.mxu0 0.0
    %140 = vmatpush1.xpose.msra.mxu0 0.0
    %141 = vmatprep.subr.mxu0 0.0
    %142 = vmatpush1.xpose.msra.mxu0 0.0
    %143 = vmatprep.subr.mxu0 0.0
    %144 = vmatpush1.xpose.msra.mxu0 0.0
    %145 = vmatprep.subr.mxu0 0.0
    %146 = vmatpush1.xpose.msra.mxu0 0.0
    %147 = vmatprep.subr.mxu0 0.0
    %148 = vmatpush1.xpose.msra.mxu0 0.0
    %149 = vmatprep.subr.mxu0 0.0
    %150 = vmatpush1.xpose.msra.mxu0 0.0
    %151 = vmatprep.subr.mxu0 0.0
    %152 = vmatpush1.xpose.msra.mxu0 0.0
    %153 = vmatprep.subr.mxu0 0.0
    %154 = vmatpush1.xpose.msra.mxu0 0.0
    %155 = vmatprep.subr.mxu0 0.0
    %156 = vmatpush1.xpose.msra.mxu0 0.0
    %157 = vmatprep.subr.mxu0 0.0
    %158 = vmatpush1.xpose.msra.mxu0 0.0
    %159 = vmatprep.subr.mxu0 0.0
    %160 = vmatpush1.xpose.msra.mxu0 0.0
    %161 = vmatprep.subr.mxu0 0.0
    %162 = vmatpush1.xpose.msra.mxu0 0.0
    %163 = vmatprep.subr.mxu0 0.0
    %164 = vmatpush1.xpose.msra.mxu0 0.0
    %165 = vmatprep.subr.mxu0 0.0
    %166 = vmatpush1.xpose.msra.mxu0 0.0
    %167 = vmatprep.subr.mxu0 0.0
    %168 = vmatpush1.xpose.msra.mxu0 0.0
    %169 = vmatprep.subr.mxu0 0.0
    %170 = vmatpush1.xpose.msra.mxu0 0.0
    %171 = vmatprep.subr.mxu0 0.0
    %172 = vmatpush1.xpose.msra.mxu0 0.0
    %173 = vmatprep.subr.mxu0 0.0
    %174 = vmatpush1.xpose.msra.mxu0 0.0
    %175 = vmatprep.subr.mxu0 0.0
    %176 = vmatpush1.xpose.msra.mxu0 0.0
    %177 = vmatprep.subr.mxu0 0.0
    %178 = vmatpush1.xpose.msra.mxu0 0.0
    %179 = vmatprep.subr.mxu0 0.0
    %180 = vmatpush1.xpose.msra.mxu0 0.0
    %181 = vmatprep.subr.mxu0 0.0
    %182 = vmatpush1.xpose.msra.mxu0 0.0
    %183 = vmatprep.subr.mxu0 0.0
    %184 = vmatpush1.xpose.msra.mxu0 0.0
    %185 = vmatprep.subr.mxu0 0.0
    %186 = vmatpush1.xpose.msra.mxu0 0.0
    %187 = vmatprep.subr.mxu0 0.0
    %188 = vmatpush1.xpose.msra.mxu0 0.0
    %189 = vmatprep.subr.mxu0 0.0
    %190 = vmatpush1.xpose.msra.mxu0 0.0
    %191 = vmatprep.subr.mxu0 0.0
    %192 = vmatpush1.xpose.msra.mxu0 0.0
    %193 = vmatprep.subr.mxu0 0.0
    %194 = vmatpush1.xpose.msra.mxu0 0.0
    %195 = vmatprep.subr.mxu0 0.0
    %196 = vmatpush1.xpose.msra.mxu0 0.0
    %197 = vmatprep.subr.mxu0 0.0
    %198 = vmatpush1.xpose.msra.mxu0 0.0
    %199 = vmatprep.mubr.f32.mxu0 0.0
    %200 = vmatmul.mubr.f32.gmra.mrb[0].mxu0 %v131
    %v201 = vpop.f32.mrb[0].mxu0
    %v202 = vadd.f32 0.0, %v201
    %v203 = vpop.f32.mrb[0].mxu0
    %204 = vdwg.mxu0
    %205 = vrot.lane.b32.xlu0 %v111, 96
    %v206 = vpop.permute.xlu0 %205
    %v207 = vsel %vm130, %v111, 0
    %v209 = vsel %vm130, %v206, 0
    %211 = vmatprep.subr.mxu0 0.0
    %212 = vmatpush1.xpose.msra.mxu0 %v209
    %213 = vmatprep.subr.mxu0 0.0
    %214 = vmatpush1.xpose.msra.mxu0 0.0
    %215 = vmatprep.subr.mxu0 0.0
    %216 = vmatpush1.xpose.msra.mxu0 0.0
    %217 = vmatprep.subr.mxu0 0.0
    %218 = vmatpush1.xpose.msra.mxu0 0.0
    %219 = vmatprep.subr.mxu0 0.0
    %220 = vmatpush1.xpose.msra.mxu0 0.0
    %221 = vmatprep.subr.mxu0 0.0
    %222 = vmatpush1.xpose.msra.mxu0 0.0
    %223 = vmatprep.subr.mxu0 0.0
    %224 = vmatpush1.xpose.msra.mxu0 0.0
    %225 = vmatprep.subr.mxu0 0.0
    %226 = vmatpush1.xpose.msra.mxu0 0.0
    %227 = vmatprep.subr.mxu0 0.0
    %228 = vmatpush1.xpose.msra.mxu0 0.0
    %229 = vmatprep.subr.mxu0 0.0
    %230 = vmatpush1.xpose.msra.mxu0 0.0
    %231 = vmatprep.subr.mxu0 0.0
    %232 = vmatpush1.xpose.msra.mxu0 0.0
    %233 = vmatprep.subr.mxu0 0.0
    %234 = vmatpush1.xpose.msra.mxu0 0.0
    %235 = vmatprep.subr.mxu0 0.0
    %236 = vmatpush1.xpose.msra.mxu0 0.0
    %237 = vmatprep.subr.mxu0 0.0
    %238 = vmatpush1.xpose.msra.mxu0 0.0
    %239 = vmatprep.subr.mxu0 0.0
    %240 = vmatpush1.xpose.msra.mxu0 0.0
    %241 = vmatprep.subr.mxu0 0.0
    %242 = vmatpush1.xpose.msra.mxu0 0.0
    %243 = vmatprep.subr.mxu0 0.0
    %244 = vmatpush1.xpose.msra.mxu0 0.0
    %245 = vmatprep.subr.mxu0 0.0
    %246 = vmatpush1.xpose.msra.mxu0 0.0
    %247 = vmatprep.subr.mxu0 0.0
    %248 = vmatpush1.xpose.msra.mxu0 0.0
    %249 = vmatprep.subr.mxu0 0.0
    %250 = vmatpush1.xpose.msra.mxu0 0.0
    %251 = vmatprep.subr.mxu0 0.0
    %252 = vmatpush1.xpose.msra.mxu0 0.0
    %253 = vmatprep.subr.mxu0 0.0
    %254 = vmatpush1.xpose.msra.mxu0 0.0
    %255 = vmatprep.subr.mxu0 0.0
    %256 = vmatpush1.xpose.msra.mxu0 0.0
    %257 = vmatprep.subr.mxu0 0.0
    %258 = vmatpush1.xpose.msra.mxu0 0.0
    %259 = vmatprep.subr.mxu0 0.0
    %260 = vmatpush1.xpose.msra.mxu0 0.0
    %261 = vmatprep.subr.mxu0 0.0
    %262 = vmatpush1.xpose.msra.mxu0 0.0
    %263 = vmatprep.subr.mxu0 0.0
    %264 = vmatpush1.xpose.msra.mxu0 0.0
    %265 = vmatprep.subr.mxu0 0.0
    %266 = vmatpush1.xpose.msra.mxu0 0.0
    %267 = vmatprep.subr.mxu0 0.0
    %268 = vmatpush1.xpose.msra.mxu0 0.0
    %269 = vmatprep.subr.mxu0 0.0
    %270 = vmatpush1.xpose.msra.mxu0 0.0
    %271 = vmatprep.subr.mxu0 0.0
    %272 = vmatpush1.xpose.msra.mxu0 0.0
    %273 = vmatprep.subr.mxu0 0.0
    %274 = vmatpush1.xpose.msra.mxu0 0.0
    %275 = vmatprep.mubr.f32.mxu0 0.0
    %276 = vmatmul.mubr.f32.gmra.mrb[0].mxu0 %v207
    %v277 = vpop.f32.mrb[0].mxu0
    %v278 = vadd.f32 0.0, %v277
    %v279 = vpop.f32.mrb[0].mxu0
    %280 = vdwg.mxu0
    %281 = vrot.lane.b32.xlu0 %v117, 96
    %v282 = vpop.permute.xlu0 %281
    %v283 = vsel %vm130, %v117, 0
    %v285 = vsel %vm130, %v282, 0
    %287 = vmatprep.subr.mxu0 0.0
    %288 = vmatpush1.xpose.msra.mxu0 %v285
    %289 = vmatprep.subr.mxu0 0.0
    %290 = vmatpush1.xpose.msra.mxu0 0.0
    %291 = vmatprep.subr.mxu0 0.0
    %292 = vmatpush1.xpose.msra.mxu0 0.0
    %293 = vmatprep.subr.mxu0 0.0
    %294 = vmatpush1.xpose.msra.mxu0 0.0
    %295 = vmatprep.subr.mxu0 0.0
    %296 = vmatpush1.xpose.msra.mxu0 0.0
    %297 = vmatprep.subr.mxu0 0.0
    %298 = vmatpush1.xpose.msra.mxu0 0.0
    %299 = vmatprep.subr.mxu0 0.0
    %300 = vmatpush1.xpose.msra.mxu0 0.0
    %301 = vmatprep.subr.mxu0 0.0
    %302 = vmatpush1.xpose.msra.mxu0 0.0
    %303 = vmatprep.subr.mxu0 0.0
    %304 = vmatpush1.xpose.msra.mxu0 0.0
    %305 = vmatprep.subr.mxu0 0.0
    %306 = vmatpush1.xpose.msra.mxu0 0.0
    %307 = vmatprep.subr.mxu0 0.0
    %308 = vmatpush1.xpose.msra.mxu0 0.0
    %309 = vmatprep.subr.mxu0 0.0
    %310 = vmatpush1.xpose.msra.mxu0 0.0
    %311 = vmatprep.subr.mxu0 0.0
    %312 = vmatpush1.xpose.msra.mxu0 0.0
    %313 = vmatprep.subr.mxu0 0.0
    %314 = vmatpush1.xpose.msra.mxu0 0.0
    %315 = vmatprep.subr.mxu0 0.0
    %316 = vmatpush1.xpose.msra.mxu0 0.0
    %317 = vmatprep.subr.mxu0 0.0
    %318 = vmatpush1.xpose.msra.mxu0 0.0
    %319 = vmatprep.subr.mxu0 0.0
    %320 = vmatpush1.xpose.msra.mxu0 0.0
    %321 = vmatprep.subr.mxu0 0.0
    %322 = vmatpush1.xpose.msra.mxu0 0.0
    %323 = vmatprep.subr.mxu0 0.0
    %324 = vmatpush1.xpose.msra.mxu0 0.0
    %325 = vmatprep.subr.mxu0 0.0
    %326 = vmatpush1.xpose.msra.mxu0 0.0
    %327 = vmatprep.subr.mxu0 0.0
    %328 = vmatpush1.xpose.msra.mxu0 0.0
    %329 = vmatprep.subr.mxu0 0.0
    %330 = vmatpush1.xpose.msra.mxu0 0.0
    %331 = vmatprep.subr.mxu0 0.0
    %332 = vmatpush1.xpose.msra.mxu0 0.0
    %333 = vmatprep.subr.mxu0 0.0
    %334 = vmatpush1.xpose.msra.mxu0 0.0
    %335 = vmatprep.subr.mxu0 0.0
    %336 = vmatpush1.xpose.msra.mxu0 0.0
    %337 = vmatprep.subr.mxu0 0.0
    %338 = vmatpush1.xpose.msra.mxu0 0.0
    %339 = vmatprep.subr.mxu0 0.0
    %340 = vmatpush1.xpose.msra.mxu0 0.0
    %341 = vmatprep.subr.mxu0 0.0
    %342 = vmatpush1.xpose.msra.mxu0 0.0
    %343 = vmatprep.subr.mxu0 0.0
    %344 = vmatpush1.xpose.msra.mxu0 0.0
    %345 = vmatprep.subr.mxu0 0.0
    %346 = vmatpush1.xpose.msra.mxu0 0.0
    %347 = vmatprep.subr.mxu0 0.0
    %348 = vmatpush1.xpose.msra.mxu0 0.0
    %349 = vmatprep.subr.mxu0 0.0
    %350 = vmatpush1.xpose.msra.mxu0 0.0
    %351 = vmatprep.mubr.f32.mxu0 0.0
    %352 = vmatmul.mubr.f32.gmra.mrb[0].mxu0 %v283
    %v353 = vpop.f32.mrb[0].mxu0
    %v354 = vadd.f32 0.0, %v353
    %v355 = vpop.f32.mrb[0].mxu0
    %356 = vdwg.mxu0
    %357 = vrot.lane.b32.xlu0 %v119, 96
    %v358 = vpop.permute.xlu0 %357
    %v359 = vsel %vm130, %v119, 0
    %v361 = vsel %vm130, %v358, 0
    %363 = vmatprep.subr.mxu0 0.0
    %364 = vmatpush1.xpose.msra.mxu0 %v361
    %365 = vmatprep.subr.mxu0 0.0
    %366 = vmatpush1.xpose.msra.mxu0 0.0
    %367 = vmatprep.subr.mxu0 0.0
    %368 = vmatpush1.xpose.msra.mxu0 0.0
    %369 = vmatprep.subr.mxu0 0.0
    %370 = vmatpush1.xpose.msra.mxu0 0.0
    %371 = vmatprep.subr.mxu0 0.0
    %372 = vmatpush1.xpose.msra.mxu0 0.0
    %373 = vmatprep.subr.mxu0 0.0
    %374 = vmatpush1.xpose.msra.mxu0 0.0
    %375 = vmatprep.subr.mxu0 0.0
    %376 = vmatpush1.xpose.msra.mxu0 0.0
    %377 = vmatprep.subr.mxu0 0.0
    %378 = vmatpush1.xpose.msra.mxu0 0.0
    %379 = vmatprep.subr.mxu0 0.0
    %380 = vmatpush1.xpose.msra.mxu0 0.0
    %381 = vmatprep.subr.mxu0 0.0
    %382 = vmatpush1.xpose.msra.mxu0 0.0
    %383 = vmatprep.subr.mxu0 0.0
    %384 = vmatpush1.xpose.msra.mxu0 0.0
    %385 = vmatprep.subr.mxu0 0.0
    %386 = vmatpush1.xpose.msra.mxu0 0.0
    %387 = vmatprep.subr.mxu0 0.0
    %388 = vmatpush1.xpose.msra.mxu0 0.0
    %389 = vmatprep.subr.mxu0 0.0
    %390 = vmatpush1.xpose.msra.mxu0 0.0
    %391 = vmatprep.subr.mxu0 0.0
    %392 = vmatpush1.xpose.msra.mxu0 0.0
    %393 = vmatprep.subr.mxu0 0.0
    %394 = vmatpush1.xpose.msra.mxu0 0.0
    %395 = vmatprep.subr.mxu0 0.0
    %396 = vmatpush1.xpose.msra.mxu0 0.0
    %397 = vmatprep.subr.mxu0 0.0
    %398 = vmatpush1.xpose.msra.mxu0 0.0
    %399 = vmatprep.subr.mxu0 0.0
    %400 = vmatpush1.xpose.msra.mxu0 0.0
    %401 = vmatprep.subr.mxu0 0.0
    %402 = vmatpush1.xpose.msra.mxu0 0.0
    %403 = vmatprep.subr.mxu0 0.0
    %404 = vmatpush1.xpose.msra.mxu0 0.0
    %405 = vmatprep.subr.mxu0 0.0
    %406 = vmatpush1.xpose.msra.mxu0 0.0
    %407 = vmatprep.subr.mxu0 0.0
    %408 = vmatpush1.xpose.msra.mxu0 0.0
    %409 = vmatprep.subr.mxu0 0.0
    %410 = vmatpush1.xpose.msra.mxu0 0.0
    %411 = vmatprep.subr.mxu0 0.0
    %412 = vmatpush1.xpose.msra.mxu0 0.0
    %413 = vmatprep.subr.mxu0 0.0
    %414 = vmatpush1.xpose.msra.mxu0 0.0
    %415 = vmatprep.subr.mxu0 0.0
    %416 = vmatpush1.xpose.msra.mxu0 0.0
    %417 = vmatprep.subr.mxu0 0.0
    %418 = vmatpush1.xpose.msra.mxu0 0.0
    %419 = vmatprep.subr.mxu0 0.0
    %420 = vmatpush1.xpose.msra.mxu0 0.0
    %421 = vmatprep.subr.mxu0 0.0
    %422 = vmatpush1.xpose.msra.mxu0 0.0
    %423 = vmatprep.subr.mxu0 0.0
    %424 = vmatpush1.xpose.msra.mxu0 0.0
    %425 = vmatprep.subr.mxu0 0.0
    %426 = vmatpush1.xpose.msra.mxu0 0.0
    %427 = vmatprep.mubr.f32.mxu0 0.0
    %428 = vmatmul.mubr.f32.gmra.mrb[0].mxu0 %v359
    %v429 = vpop.f32.mrb[0].mxu0
    %v430 = vadd.f32 0.0, %v429
    %v431 = vpop.f32.mrb[0].mxu0
    %432 = vdwg.mxu0
    %433 = vrot.lane.b32.xlu0 %v121, 96
    %v434 = vpop.permute.xlu0 %433
    %v435 = vsel %vm130, %v121, 0
    %v437 = vsel %vm130, %v434, 0
    %439 = vmatprep.subr.mxu0 0.0
    %440 = vmatpush1.xpose.msra.mxu0 %v437
    %441 = vmatprep.subr.mxu0 0.0
    %442 = vmatpush1.xpose.msra.mxu0 0.0
    %443 = vmatprep.subr.mxu0 0.0
    %444 = vmatpush1.xpose.msra.mxu0 0.0
    %445 = vmatprep.subr.mxu0 0.0
    %446 = vmatpush1.xpose.msra.mxu0 0.0
    %447 = vmatprep.subr.mxu0 0.0
    %448 = vmatpush1.xpose.msra.mxu0 0.0
    %449 = vmatprep.subr.mxu0 0.0
    %450 = vmatpush1.xpose.msra.mxu0 0.0
    %451 = vmatprep.subr.mxu0 0.0
    %452 = vmatpush1.xpose.msra.mxu0 0.0
    %453 = vmatprep.subr.mxu0 0.0
    %454 = vmatpush1.xpose.msra.mxu0 0.0
    %455 = vmatprep.subr.mxu0 0.0
    %456 = vmatpush1.xpose.msra.mxu0 0.0
    %457 = vmatprep.subr.mxu0 0.0
    %458 = vmatpush1.xpose.msra.mxu0 0.0
    %459 = vmatprep.subr.mxu0 0.0
    %460 = vmatpush1.xpose.msra.mxu0 0.0
    %461 = vmatprep.subr.mxu0 0.0
    %462 = vmatpush1.xpose.msra.mxu0 0.0
    %463 = vmatprep.subr.mxu0 0.0
    %464 = vmatpush1.xpose.msra.mxu0 0.0
    %465 = vmatprep.subr.mxu0 0.0
    %466 = vmatpush1.xpose.msra.mxu0 0.0
    %467 = vmatprep.subr.mxu0 0.0
    %468 = vmatpush1.xpose.msra.mxu0 0.0
    %469 = vmatprep.subr.mxu0 0.0
    %470 = vmatpush1.xpose.msra.mxu0 0.0
    %471 = vmatprep.subr.mxu0 0.0
    %472 = vmatpush1.xpose.msra.mxu0 0.0
    %473 = vmatprep.subr.mxu0 0.0
    %474 = vmatpush1.xpose.msra.mxu0 0.0
    %475 = vmatprep.subr.mxu0 0.0
    %476 = vmatpush1.xpose.msra.mxu0 0.0
    %477 = vmatprep.subr.mxu0 0.0
    %478 = vmatpush1.xpose.msra.mxu0 0.0
    %479 = vmatprep.subr.mxu0 0.0
    %480 = vmatpush1.xpose.msra.mxu0 0.0
    %481 = vmatprep.subr.mxu0 0.0
    %482 = vmatpush1.xpose.msra.mxu0 0.0
    %483 = vmatprep.subr.mxu0 0.0
    %484 = vmatpush1.xpose.msra.mxu0 0.0
    %485 = vmatprep.subr.mxu0 0.0
    %486 = vmatpush1.xpose.msra.mxu0 0.0
    %487 = vmatprep.subr.mxu0 0.0
    %488 = vmatpush1.xpose.msra.mxu0 0.0
    %489 = vmatprep.subr.mxu0 0.0
    %490 = vmatpush1.xpose.msra.mxu0 0.0
    %491 = vmatprep.subr.mxu0 0.0
    %492 = vmatpush1.xpose.msra.mxu0 0.0
    %493 = vmatprep.subr.mxu0 0.0
    %494 = vmatpush1.xpose.msra.mxu0 0.0
    %495 = vmatprep.subr.mxu0 0.0
    %496 = vmatpush1.xpose.msra.mxu0 0.0
    %497 = vmatprep.subr.mxu0 0.0
    %498 = vmatpush1.xpose.msra.mxu0 0.0
    %499 = vmatprep.subr.mxu0 0.0
    %500 = vmatpush1.xpose.msra.mxu0 0.0
    %501 = vmatprep.subr.mxu0 0.0
    %502 = vmatpush1.xpose.msra.mxu0 0.0
    %503 = vmatprep.mubr.f32.mxu0 0.0
    %504 = vmatmul.mubr.f32.gmra.mrb[0].mxu0 %v435
    %v505 = vpop.f32.mrb[0].mxu0
    %v506 = vadd.f32 0.0, %v505
    %v507 = vpop.f32.mrb[0].mxu0
    %508 = vdwg.mxu0
    %509 = vrot.lane.b32.xlu0 %v123, 96
    %v510 = vpop.permute.xlu0 %509
    %v511 = vsel %vm130, %v123, 0
    %v513 = vsel %vm130, %v510, 0
    %515 = vmatprep.subr.mxu0 0.0
    %516 = vmatpush1.xpose.msra.mxu0 %v513
    %517 = vmatprep.subr.mxu0 0.0
    %518 = vmatpush1.xpose.msra.mxu0 0.0
    %519 = vmatprep.subr.mxu0 0.0
    %520 = vmatpush1.xpose.msra.mxu0 0.0
    %521 = vmatprep.subr.mxu0 0.0
    %522 = vmatpush1.xpose.msra.mxu0 0.0
    %523 = vmatprep.subr.mxu0 0.0
    %524 = vmatpush1.xpose.msra.mxu0 0.0
    %525 = vmatprep.subr.mxu0 0.0
    %526 = vmatpush1.xpose.msra.mxu0 0.0
    %527 = vmatprep.subr.mxu0 0.0
    %528 = vmatpush1.xpose.msra.mxu0 0.0
    %529 = vmatprep.subr.mxu0 0.0
    %530 = vmatpush1.xpose.msra.mxu0 0.0
    %531 = vmatprep.subr.mxu0 0.0
    %532 = vmatpush1.xpose.msra.mxu0 0.0
    %533 = vmatprep.subr.mxu0 0.0
    %534 = vmatpush1.xpose.msra.mxu0 0.0
    %535 = vmatprep.subr.mxu0 0.0
    %536 = vmatpush1.xpose.msra.mxu0 0.0
    %537 = vmatprep.subr.mxu0 0.0
    %538 = vmatpush1.xpose.msra.mxu0 0.0
    %539 = vmatprep.subr.mxu0 0.0
    %540 = vmatpush1.xpose.msra.mxu0 0.0
    %541 = vmatprep.subr.mxu0 0.0
    %542 = vmatpush1.xpose.msra.mxu0 0.0
    %543 = vmatprep.subr.mxu0 0.0
    %544 = vmatpush1.xpose.msra.mxu0 0.0
    %545 = vmatprep.subr.mxu0 0.0
    %546 = vmatpush1.xpose.msra.mxu0 0.0
    %547 = vmatprep.subr.mxu0 0.0
    %548 = vmatpush1.xpose.msra.mxu0 0.0
    %549 = vmatprep.subr.mxu0 0.0
    %550 = vmatpush1.xpose.msra.mxu0 0.0
    %551 = vmatprep.subr.mxu0 0.0
    %552 = vmatpush1.xpose.msra.mxu0 0.0
    %553 = vmatprep.subr.mxu0 0.0
    %554 = vmatpush1.xpose.msra.mxu0 0.0
    %555 = vmatprep.subr.mxu0 0.0
    %556 = vmatpush1.xpose.msra.mxu0 0.0
    %557 = vmatprep.subr.mxu0 0.0
    %558 = vmatpush1.xpose.msra.mxu0 0.0
    %559 = vmatprep.subr.mxu0 0.0
    %560 = vmatpush1.xpose.msra.mxu0 0.0
    %561 = vmatprep.subr.mxu0 0.0
    %562 = vmatpush1.xpose.msra.mxu0 0.0
    %563 = vmatprep.subr.mxu0 0.0
    %564 = vmatpush1.xpose.msra.mxu0 0.0
    %565 = vmatprep.subr.mxu0 0.0
    %566 = vmatpush1.xpose.msra.mxu0 0.0
    %567 = vmatprep.subr.mxu0 0.0
    %568 = vmatpush1.xpose.msra.mxu0 0.0
    %569 = vmatprep.subr.mxu0 0.0
    %570 = vmatpush1.xpose.msra.mxu0 0.0
    %571 = vmatprep.subr.mxu0 0.0
    %572 = vmatpush1.xpose.msra.mxu0 0.0
    %573 = vmatprep.subr.mxu0 0.0
    %574 = vmatpush1.xpose.msra.mxu0 0.0
    %575 = vmatprep.subr.mxu0 0.0
    %576 = vmatpush1.xpose.msra.mxu0 0.0
    %577 = vmatprep.subr.mxu0 0.0
    %578 = vmatpush1.xpose.msra.mxu0 0.0
    %579 = vmatprep.mubr.f32.mxu0 0.0
    %580 = vmatmul.mubr.f32.gmra.mrb[0].mxu0 %v511
    %v581 = vpop.f32.mrb[0].mxu0
    %v582 = vadd.f32 0.0, %v581
    %v583 = vpop.f32.mrb[0].mxu0
    %584 = vdwg.mxu0
    %585 = vrot.lane.b32.xlu0 %v125, 96
    %v586 = vpop.permute.xlu0 %585
    %v587 = vsel %vm130, %v125, 0
    %v589 = vsel %vm130, %v586, 0
    %591 = vmatprep.subr.mxu0 0.0
    %592 = vmatpush1.xpose.msra.mxu0 %v589
    %593 = vmatprep.subr.mxu0 0.0
    %594 = vmatpush1.xpose.msra.mxu0 0.0
    %595 = vmatprep.subr.mxu0 0.0
    %596 = vmatpush1.xpose.msra.mxu0 0.0
    %597 = vmatprep.subr.mxu0 0.0
    %598 = vmatpush1.xpose.msra.mxu0 0.0
    %599 = vmatprep.subr.mxu0 0.0
    %600 = vmatpush1.xpose.msra.mxu0 0.0
    %601 = vmatprep.subr.mxu0 0.0
    %602 = vmatpush1.xpose.msra.mxu0 0.0
    %603 = vmatprep.subr.mxu0 0.0
    %604 = vmatpush1.xpose.msra.mxu0 0.0
    %605 = vmatprep.subr.mxu0 0.0
    %606 = vmatpush1.xpose.msra.mxu0 0.0
    %607 = vmatprep.subr.mxu0 0.0
    %608 = vmatpush1.xpose.msra.mxu0 0.0
    %609 = vmatprep.subr.mxu0 0.0
    %610 = vmatpush1.xpose.msra.mxu0 0.0
    %611 = vmatprep.subr.mxu0 0.0
    %612 = vmatpush1.xpose.msra.mxu0 0.0
    %613 = vmatprep.subr.mxu0 0.0
    %614 = vmatpush1.xpose.msra.mxu0 0.0
    %615 = vmatprep.subr.mxu0 0.0
    %616 = vmatpush1.xpose.msra.mxu0 0.0
    %617 = vmatprep.subr.mxu0 0.0
    %618 = vmatpush1.xpose.msra.mxu0 0.0
    %619 = vmatprep.subr.mxu0 0.0
    %620 = vmatpush1.xpose.msra.mxu0 0.0
    %621 = vmatprep.subr.mxu0 0.0
    %622 = vmatpush1.xpose.msra.mxu0 0.0
    %623 = vmatprep.subr.mxu0 0.0
    %624 = vmatpush1.xpose.msra.mxu0 0.0
    %625 = vmatprep.subr.mxu0 0.0
    %626 = vmatpush1.xpose.msra.mxu0 0.0
    %627 = vmatprep.subr.mxu0 0.0
    %628 = vmatpush1.xpose.msra.mxu0 0.0
    %629 = vmatprep.subr.mxu0 0.0
    %630 = vmatpush1.xpose.msra.mxu0 0.0
    %631 = vmatprep.subr.mxu0 0.0
    %632 = vmatpush1.xpose.msra.mxu0 0.0
    %633 = vmatprep.subr.mxu0 0.0
    %634 = vmatpush1.xpose.msra.mxu0 0.0
    %635 = vmatprep.subr.mxu0 0.0
    %636 = vmatpush1.xpose.msra.mxu0 0.0
    %637 = vmatprep.subr.mxu0 0.0
    %638 = vmatpush1.xpose.msra.mxu0 0.0
    %639 = vmatprep.subr.mxu0 0.0
    %640 = vmatpush1.xpose.msra.mxu0 0.0
    %641 = vmatprep.subr.mxu0 0.0
    %642 = vmatpush1.xpose.msra.mxu0 0.0
    %643 = vmatprep.subr.mxu0 0.0
    %644 = vmatpush1.xpose.msra.mxu0 0.0
    %645 = vmatprep.subr.mxu0 0.0
    %646 = vmatpush1.xpose.msra.mxu0 0.0
    %647 = vmatprep.subr.mxu0 0.0
    %648 = vmatpush1.xpose.msra.mxu0 0.0
    %649 = vmatprep.subr.mxu0 0.0
    %650 = vmatpush1.xpose.msra.mxu0 0.0
    %651 = vmatprep.subr.mxu0 0.0
    %652 = vmatpush1.xpose.msra.mxu0 0.0
    %653 = vmatprep.subr.mxu0 0.0
    %654 = vmatpush1.xpose.msra.mxu0 0.0
    %655 = vmatprep.mubr.f32.mxu0 0.0
    %656 = vmatmul.mubr.f32.gmra.mrb[0].mxu0 %v587
    %v657 = vpop.f32.mrb[0].mxu0
    %v658 = vadd.f32 0.0, %v657
    %v659 = vpop.f32.mrb[0].mxu0
    %660 = vdwg.mxu0
    %661 = vrot.lane.b32.xlu0 %v127, 96
    %v662 = vpop.permute.xlu0 %661
    %v663 = vsel %vm130, %v127, 0
    %v665 = vsel %vm130, %v662, 0
    %667 = vmatprep.subr.mxu0 0.0
    %668 = vmatpush1.xpose.msra.mxu0 %v665
    %669 = vmatprep.subr.mxu0 0.0
    %670 = vmatpush1.xpose.msra.mxu0 0.0
    %671 = vmatprep.subr.mxu0 0.0
    %672 = vmatpush1.xpose.msra.mxu0 0.0
    %673 = vmatprep.subr.mxu0 0.0
    %674 = vmatpush1.xpose.msra.mxu0 0.0
    %675 = vmatprep.subr.mxu0 0.0
    %676 = vmatpush1.xpose.msra.mxu0 0.0
    %677 = vmatprep.subr.mxu0 0.0
    %678 = vmatpush1.xpose.msra.mxu0 0.0
    %679 = vmatprep.subr.mxu0 0.0
    %680 = vmatpush1.xpose.msra.mxu0 0.0
    %681 = vmatprep.subr.mxu0 0.0
    %682 = vmatpush1.xpose.msra.mxu0 0.0
    %683 = vmatprep.subr.mxu0 0.0
    %684 = vmatpush1.xpose.msra.mxu0 0.0
    %685 = vmatprep.subr.mxu0 0.0
    %686 = vmatpush1.xpose.msra.mxu0 0.0
    %687 = vmatprep.subr.mxu0 0.0
    %688 = vmatpush1.xpose.msra.mxu0 0.0
    %689 = vmatprep.subr.mxu0 0.0
    %690 = vmatpush1.xpose.msra.mxu0 0.0
    %691 = vmatprep.subr.mxu0 0.0
    %692 = vmatpush1.xpose.msra.mxu0 0.0
    %693 = vmatprep.subr.mxu0 0.0
    %694 = vmatpush1.xpose.msra.mxu0 0.0
    %695 = vmatprep.subr.mxu0 0.0
    %696 = vmatpush1.xpose.msra.mxu0 0.0
    %697 = vmatprep.subr.mxu0 0.0
    %698 = vmatpush1.xpose.msra.mxu0 0.0
    %699 = vmatprep.subr.mxu0 0.0
    %700 = vmatpush1.xpose.msra.mxu0 0.0
    %701 = vmatprep.subr.mxu0 0.0
    %702 = vmatpush1.xpose.msra.mxu0 0.0
    %703 = vmatprep.subr.mxu0 0.0
    %704 = vmatpush1.xpose.msra.mxu0 0.0
    %705 = vmatprep.subr.mxu0 0.0
    %706 = vmatpush1.xpose.msra.mxu0 0.0
    %707 = vmatprep.subr.mxu0 0.0
    %708 = vmatpush1.xpose.msra.mxu0 0.0
    %709 = vmatprep.subr.mxu0 0.0
    %710 = vmatpush1.xpose.msra.mxu0 0.0
    %711 = vmatprep.subr.mxu0 0.0
    %712 = vmatpush1.xpose.msra.mxu0 0.0
    %713 = vmatprep.subr.mxu0 0.0
    %714 = vmatpush1.xpose.msra.mxu0 0.0
    %715 = vmatprep.subr.mxu0 0.0
    %716 = vmatpush1.xpose.msra.mxu0 0.0
    %717 = vmatprep.subr.mxu0 0.0
    %718 = vmatpush1.xpose.msra.mxu0 0.0
    %719 = vmatprep.subr.mxu0 0.0
    %720 = vmatpush1.xpose.msra.mxu0 0.0
    %721 = vmatprep.subr.mxu0 0.0
    %722 = vmatpush1.xpose.msra.mxu0 0.0
    %723 = vmatprep.subr.mxu0 0.0
    %724 = vmatpush1.xpose.msra.mxu0 0.0
    %725 = vmatprep.subr.mxu0 0.0
    %726 = vmatpush1.xpose.msra.mxu0 0.0
    %727 = vmatprep.subr.mxu0 0.0
    %728 = vmatpush1.xpose.msra.mxu0 0.0
    %729 = vmatprep.subr.mxu0 0.0
    %730 = vmatpush1.xpose.msra.mxu0 0.0
    %731 = vmatprep.mubr.f32.mxu0 0.0
    %732 = vmatmul.mubr.f32.gmra.mrb[0].mxu0 %v663
    %v733 = vpop.f32.mrb[0].mxu0
    %v734 = vadd.f32 0.0, %v733
    %v735 = vpop.f32.mrb[0].mxu0
    %736 = vdwg.mxu0
    %v737 = vsel %vm130, %v202, -inf
    %738 = vmax.xlane.f32.xlu0 %v737
    %v739 = vpop.xlane.xlu0 %738
    %v740 = vsel %vm130, %v278, -inf
    %741 = vmax.xlane.f32.xlu0 %v740
    %v742 = vpop.xlane.xlu0 %741
    %v743 = vsel %vm130, %v354, -inf
    %744 = vmax.xlane.f32.xlu0 %v743
    %v745 = vpop.xlane.xlu0 %744
    %v746 = vsel %vm130, %v430, -inf
    %747 = vmax.xlane.f32.xlu0 %v746
    %v748 = vpop.xlane.xlu0 %747
    %v749 = vsel %vm130, %v506, -inf
    %750 = vmax.xlane.f32.xlu0 %v749
    %v751 = vpop.xlane.xlu0 %750
    %v752 = vsel %vm130, %v582, -inf
    %753 = vmax.xlane.f32.xlu0 %v752
    %v754 = vpop.xlane.xlu0 %753
    %v755 = vsel %vm130, %v658, -inf
    %756 = vmax.xlane.f32.xlu0 %v755
    %v757 = vpop.xlane.xlu0 %756
    %v758 = vsel %vm130, %v734, -inf
    %759 = vmax.xlane.f32.xlu0 %v758
    %v760 = vpop.xlane.xlu0 %759
    %v761 = vsub.f32 %v202, %v739
    %v762 = vsub.f32 %v278, %v742
    %v763 = vsub.f32 %v354, %v745
    %v764 = vsub.f32 %v430, %v748
    %v765 = vsub.f32 %v506, %v751
    %v766 = vsub.f32 %v582, %v754
    %v767 = vsub.f32 %v658, %v757
    %v768 = vsub.f32 %v734, %v760
    %v769 = vmul.f32 %v761, 1.442695
    %v770 = vpow.pop %v769
    %v771 = vmul.f32 %v762, 1.442695
    %v772 = vpow.pop %v771
    %v773 = vmul.f32 %v763, 1.442695
    %v774 = vpow.pop %v773
    %v775 = vmul.f32 %v764, 1.442695
    %v776 = vpow.pop %v775
    %v777 = vmul.f32 %v765, 1.442695
    %v778 = vpow.pop %v777
    %v779 = vmul.f32 %v766, 1.442695
    %v780 = vpow.pop %v779
    %v781 = vmul.f32 %v767, 1.442695
    %v782 = vpow.pop %v781
    %v783 = vmul.f32 %v768, 1.442695
    %v784 = vpow.pop %v783
    %v785 = vsel %vm130, %v770, 0.0
    %786 = vadd.xlane.f32.xlu0 %v785
    %v787 = vpop.xlane.xlu0 %786
    %v788 = vsel %vm130, %v772, 0.0
    %789 = vadd.xlane.f32.xlu0 %v788
    %v790 = vpop.xlane.xlu0 %789
    %v791 = vsel %vm130, %v774, 0.0
    %792 = vadd.xlane.f32.xlu0 %v791
    %v793 = vpop.xlane.xlu0 %792
    %v794 = vsel %vm130, %v776, 0.0
    %795 = vadd.xlane.f32.xlu0 %v794
    %v796 = vpop.xlane.xlu0 %795
    %v797 = vsel %vm130, %v778, 0.0
    %798 = vadd.xlane.f32.xlu0 %v797
    %v799 = vpop.xlane.xlu0 %798
    %v800 = vsel %vm130, %v780, 0.0
    %801 = vadd.xlane.f32.xlu0 %v800
    %v802 = vpop.xlane.xlu0 %801
    %v803 = vsel %vm130, %v782, 0.0
    %804 = vadd.xlane.f32.xlu0 %v803
    %v805 = vpop.xlane.xlu0 %804
    %v806 = vsel %vm130, %v784, 0.0
    %807 = vadd.xlane.f32.xlu0 %v806
    %v808 = vpop.xlane.xlu0 %807
    %v809 = vrcp.pop %v787
    %v810 = vmul.f32 %v770, %v809
    %v811 = vrcp.pop %v790
    %v812 = vmul.f32 %v772, %v811
    %v813 = vrcp.pop %v793
    %v814 = vmul.f32 %v774, %v813
    %v815 = vrcp.pop %v796
    %v816 = vmul.f32 %v776, %v815
    %v817 = vrcp.pop %v799
    %v818 = vmul.f32 %v778, %v817
    %v819 = vrcp.pop %v802
    %v820 = vmul.f32 %v780, %v819
    %v821 = vrcp.pop %v805
    %v822 = vmul.f32 %v782, %v821
    %v823 = vrcp.pop %v808
    %v824 = vmul.f32 %v784, %v823
    %825 = vrot.lane.b32.xlu0 %v106, 64
    %v826 = vpop.permute.xlu0 %825
    %v829 = vsel %vm130, %v810, 0
    %831 = vmatprep.subr.mxu0 0.0
    %832 = vmatpush1.msra.mxu0 %v826
    %833 = vmatprep.subr.mxu0 0.0
    %834 = vmatpush1.msra.mxu0 0.0
    %835 = vmatprep.subr.mxu0 0.0
    %836 = vmatpush1.msra.mxu0 0.0
    %837 = vmatprep.subr.mxu0 0.0
    %838 = vmatpush1.msra.mxu0 0.0
    %839 = vmatprep.subr.mxu0 0.0
    %840 = vmatpush1.msra.mxu0 0.0
    %841 = vmatprep.subr.mxu0 0.0
    %842 = vmatpush1.msra.mxu0 0.0
    %843 = vmatprep.subr.mxu0 0.0
    %844 = vmatpush1.msra.mxu0 0.0
    %845 = vmatprep.subr.mxu0 0.0
    %846 = vmatpush1.msra.mxu0 0.0
    %847 = vmatprep.subr.mxu0 0.0
    %848 = vmatpush1.msra.mxu0 0.0
    %849 = vmatprep.subr.mxu0 0.0
    %850 = vmatpush1.msra.mxu0 0.0
    %851 = vmatprep.subr.mxu0 0.0
    %852 = vmatpush1.msra.mxu0 0.0
    %853 = vmatprep.subr.mxu0 0.0
    %854 = vmatpush1.msra.mxu0 0.0
    %855 = vmatprep.subr.mxu0 0.0
    %856 = vmatpush1.msra.mxu0 0.0
    %857 = vmatprep.subr.mxu0 0.0
    %858 = vmatpush1.msra.mxu0 0.0
    %859 = vmatprep.subr.mxu0 0.0
    %860 = vmatpush1.msra.mxu0 0.0
    %861 = vmatprep.subr.mxu0 0.0
    %862 = vmatpush1.msra.mxu0 0.0
    %863 = vmatprep.subr.mxu0 0.0
    %864 = vmatpush1.msra.mxu0 0.0
    %865 = vmatprep.subr.mxu0 0.0
    %866 = vmatpush1.msra.mxu0 0.0
    %867 = vmatprep.subr.mxu0 0.0
    %868 = vmatpush1.msra.mxu0 0.0
    %869 = vmatprep.subr.mxu0 0.0
    %870 = vmatpush1.msra.mxu0 0.0
    %871 = vmatprep.subr.mxu0 0.0
    %872 = vmatpush1.msra.mxu0 0.0
    %873 = vmatprep.subr.mxu0 0.0
    %874 = vmatpush1.msra.mxu0 0.0
    %875 = vmatprep.subr.mxu0 0.0
    %876 = vmatpush1.msra.mxu0 0.0
    %877 = vmatprep.subr.mxu0 0.0
    %878 = vmatpush1.msra.mxu0 0.0
    %879 = vmatprep.subr.mxu0 0.0
    %880 = vmatpush1.msra.mxu0 0.0
    %881 = vmatprep.subr.mxu0 0.0
    %882 = vmatpush1.msra.mxu0 0.0
    %883 = vmatprep.subr.mxu0 0.0
    %884 = vmatpush1.msra.mxu0 0.0
    %885 = vmatprep.subr.mxu0 0.0
    %886 = vmatpush1.msra.mxu0 0.0
    %887 = vmatprep.subr.mxu0 0.0
    %888 = vmatpush1.msra.mxu0 0.0
    %889 = vmatprep.subr.mxu0 0.0
    %890 = vmatpush1.msra.mxu0 0.0
    %891 = vmatprep.subr.mxu0 0.0
    %892 = vmatpush1.msra.mxu0 0.0
    %893 = vmatprep.subr.mxu0 0.0
    %894 = vmatpush1.msra.mxu0 0.0
    %895 = vmatprep.mubr.f32.mxu0 0.0
    %896 = vmatmul.mubr.f32.gmra.mrb[0].mxu0 %v829
    %v897 = vpop.f32.mrb[0].mxu0
    %v898 = vadd.f32 0.0, %v897
    %v899 = vpop.f32.mrb[0].mxu0
    %900 = vdwg.mxu0
    %901 = vrot.lane.b32.xlu0 %v111, 64
    %v902 = vpop.permute.xlu0 %901
    %v905 = vsel %vm130, %v812, 0
    %907 = vmatprep.subr.mxu0 0.0
    %908 = vmatpush1.msra.mxu0 %v902
    %909 = vmatprep.subr.mxu0 0.0
    %910 = vmatpush1.msra.mxu0 0.0
    %911 = vmatprep.subr.mxu0 0.0
    %912 = vmatpush1.msra.mxu0 0.0
    %913 = vmatprep.subr.mxu0 0.0
    %914 = vmatpush1.msra.mxu0 0.0
    %915 = vmatprep.subr.mxu0 0.0
    %916 = vmatpush1.msra.mxu0 0.0
    %917 = vmatprep.subr.mxu0 0.0
    %918 = vmatpush1.msra.mxu0 0.0
    %919 = vmatprep.subr.mxu0 0.0
    %920 = vmatpush1.msra.mxu0 0.0
    %921 = vmatprep.subr.mxu0 0.0
    %922 = vmatpush1.msra.mxu0 0.0
    %923 = vmatprep.subr.mxu0 0.0
    %924 = vmatpush1.msra.mxu0 0.0
    %925 = vmatprep.subr.mxu0 0.0
    %926 = vmatpush1.msra.mxu0 0.0
    %927 = vmatprep.subr.mxu0 0.0
    %928 = vmatpush1.msra.mxu0 0.0
    %929 = vmatprep.subr.mxu0 0.0
    %930 = vmatpush1.msra.mxu0 0.0
    %931 = vmatprep.subr.mxu0 0.0
    %932 = vmatpush1.msra.mxu0 0.0
    %933 = vmatprep.subr.mxu0 0.0
    %934 = vmatpush1.msra.mxu0 0.0
    %935 = vmatprep.subr.mxu0 0.0
    %936 = vmatpush1.msra.mxu0 0.0
    %937 = vmatprep.subr.mxu0 0.0
    %938 = vmatpush1.msra.mxu0 0.0
    %939 = vmatprep.subr.mxu0 0.0
    %940 = vmatpush1.msra.mxu0 0.0
    %941 = vmatprep.subr.mxu0 0.0
    %942 = vmatpush1.msra.mxu0 0.0
    %943 = vmatprep.subr.mxu0 0.0
    %944 = vmatpush1.msra.mxu0 0.0
    %945 = vmatprep.subr.mxu0 0.0
    %946 = vmatpush1.msra.mxu0 0.0
    %947 = vmatprep.subr.mxu0 0.0
    %948 = vmatpush1.msra.mxu0 0.0
    %949 = vmatprep.subr.mxu0 0.0
    %950 = vmatpush1.msra.mxu0 0.0
    %951 = vmatprep.subr.mxu0 0.0
    %952 = vmatpush1.msra.mxu0 0.0
    %953 = vmatprep.subr.mxu0 0.0
    %954 = vmatpush1.msra.mxu0 0.0
    %955 = vmatprep.subr.mxu0 0.0
    %956 = vmatpush1.msra.mxu0 0.0
    %957 = vmatprep.subr.mxu0 0.0
    %958 = vmatpush1.msra.mxu0 0.0
    %959 = vmatprep.subr.mxu0 0.0
    %960 = vmatpush1.msra.mxu0 0.0
    %961 = vmatprep.subr.mxu0 0.0
    %962 = vmatpush1.msra.mxu0 0.0
    %963 = vmatprep.subr.mxu0 0.0
    %964 = vmatpush1.msra.mxu0 0.0
    %965 = vmatprep.subr.mxu0 0.0
    %966 = vmatpush1.msra.mxu0 0.0
    %967 = vmatprep.subr.mxu0 0.0
    %968 = vmatpush1.msra.mxu0 0.0
    %969 = vmatprep.subr.mxu0 0.0
    %970 = vmatpush1.msra.mxu0 0.0
    %971 = vmatprep.mubr.f32.mxu0 0.0
    %972 = vmatmul.mubr.f32.gmra.mrb[0].mxu0 %v905
    %v973 = vpop.f32.mrb[0].mxu0
    %v974 = vadd.f32 0.0, %v973
    %v975 = vpop.f32.mrb[0].mxu0
    %976 = vdwg.mxu0
    %977 = vrot.lane.b32.xlu0 %v117, 64
    %v978 = vpop.permute.xlu0 %977
    %v981 = vsel %vm130, %v814, 0
    %983 = vmatprep.subr.mxu0 0.0
    %984 = vmatpush1.msra.mxu0 %v978
    %985 = vmatprep.subr.mxu0 0.0
    %986 = vmatpush1.msra.mxu0 0.0
    %987 = vmatprep.subr.mxu0 0.0
    %988 = vmatpush1.msra.mxu0 0.0
    %989 = vmatprep.subr.mxu0 0.0
    %990 = vmatpush1.msra.mxu0 0.0
    %991 = vmatprep.subr.mxu0 0.0
    %992 = vmatpush1.msra.mxu0 0.0
    %993 = vmatprep.subr.mxu0 0.0
    %994 = vmatpush1.msra.mxu0 0.0
    %995 = vmatprep.subr.mxu0 0.0
    %996 = vmatpush1.msra.mxu0 0.0
    %997 = vmatprep.subr.mxu0 0.0
    %998 = vmatpush1.msra.mxu0 0.0
    %999 = vmatprep.subr.mxu0 0.0
    %1000 = vmatpush1.msra.mxu0 0.0
    %1001 = vmatprep.subr.mxu0 0.0
    %1002 = vmatpush1.msra.mxu0 0.0
    %1003 = vmatprep.subr.mxu0 0.0
    %1004 = vmatpush1.msra.mxu0 0.0
    %1005 = vmatprep.subr.mxu0 0.0
    %1006 = vmatpush1.msra.mxu0 0.0
    %1007 = vmatprep.subr.mxu0 0.0
    %1008 = vmatpush1.msra.mxu0 0.0
    %1009 = vmatprep.subr.mxu0 0.0
    %1010 = vmatpush1.msra.mxu0 0.0
    %1011 = vmatprep.subr.mxu0 0.0
    %1012 = vmatpush1.msra.mxu0 0.0
    %1013 = vmatprep.subr.mxu0 0.0
    %1014 = vmatpush1.msra.mxu0 0.0
    %1015 = vmatprep.subr.mxu0 0.0
    %1016 = vmatpush1.msra.mxu0 0.0
    %1017 = vmatprep.subr.mxu0 0.0
    %1018 = vmatpush1.msra.mxu0 0.0
    %1019 = vmatprep.subr.mxu0 0.0
    %1020 = vmatpush1.msra.mxu0 0.0
    %1021 = vmatprep.subr.mxu0 0.0
    %1022 = vmatpush1.msra.mxu0 0.0
    %1023 = vmatprep.subr.mxu0 0.0
    %1024 = vmatpush1.msra.mxu0 0.0
    %1025 = vmatprep.subr.mxu0 0.0
    %1026 = vmatpush1.msra.mxu0 0.0
    %1027 = vmatprep.subr.mxu0 0.0
    %1028 = vmatpush1.msra.mxu0 0.0
    %1029 = vmatprep.subr.mxu0 0.0
    %1030 = vmatpush1.msra.mxu0 0.0
    %1031 = vmatprep.subr.mxu0 0.0
    %1032 = vmatpush1.msra.mxu0 0.0
    %1033 = vmatprep.subr.mxu0 0.0
    %1034 = vmatpush1.msra.mxu0 0.0
    %1035 = vmatprep.subr.mxu0 0.0
    %1036 = vmatpush1.msra.mxu0 0.0
    %1037 = vmatprep.subr.mxu0 0.0
    %1038 = vmatpush1.msra.mxu0 0.0
    %1039 = vmatprep.subr.mxu0 0.0
    %1040 = vmatpush1.msra.mxu0 0.0
    %1041 = vmatprep.subr.mxu0 0.0
    %1042 = vmatpush1.msra.mxu0 0.0
    %1043 = vmatprep.subr.mxu0 0.0
    %1044 = vmatpush1.msra.mxu0 0.0
    %1045 = vmatprep.subr.mxu0 0.0
    %1046 = vmatpush1.msra.mxu0 0.0
    %1047 = vmatprep.mubr.f32.mxu0 0.0
    %1048 = vmatmul.mubr.f32.gmra.mrb[0].mxu0 %v981
    %v1049 = vpop.f32.mrb[0].mxu0
    %v1050 = vadd.f32 0.0, %v1049
    %v1051 = vpop.f32.mrb[0].mxu0
    %1052 = vdwg.mxu0
    %1053 = vrot.lane.b32.xlu0 %v119, 64
    %v1054 = vpop.permute.xlu0 %1053
    %v1057 = vsel %vm130, %v816, 0
    %1059 = vmatprep.subr.mxu0 0.0
    %1060 = vmatpush1.msra.mxu0 %v1054
    %1061 = vmatprep.subr.mxu0 0.0
    %1062 = vmatpush1.msra.mxu0 0.0
    %1063 = vmatprep.subr.mxu0 0.0
    %1064 = vmatpush1.msra.mxu0 0.0
    %1065 = vmatprep.subr.mxu0 0.0
    %1066 = vmatpush1.msra.mxu0 0.0
    %1067 = vmatprep.subr.mxu0 0.0
    %1068 = vmatpush1.msra.mxu0 0.0
    %1069 = vmatprep.subr.mxu0 0.0
    %1070 = vmatpush1.msra.mxu0 0.0
    %1071 = vmatprep.subr.mxu0 0.0
    %1072 = vmatpush1.msra.mxu0 0.0
    %1073 = vmatprep.subr.mxu0 0.0
    %1074 = vmatpush1.msra.mxu0 0.0
    %1075 = vmatprep.subr.mxu0 0.0
    %1076 = vmatpush1.msra.mxu0 0.0
    %1077 = vmatprep.subr.mxu0 0.0
    %1078 = vmatpush1.msra.mxu0 0.0
    %1079 = vmatprep.subr.mxu0 0.0
    %1080 = vmatpush1.msra.mxu0 0.0
    %1081 = vmatprep.subr.mxu0 0.0
    %1082 = vmatpush1.msra.mxu0 0.0
    %1083 = vmatprep.subr.mxu0 0.0
    %1084 = vmatpush1.msra.mxu0 0.0
    %1085 = vmatprep.subr.mxu0 0.0
    %1086 = vmatpush1.msra.mxu0 0.0
    %1087 = vmatprep.subr.mxu0 0.0
    %1088 = vmatpush1.msra.mxu0 0.0
    %1089 = vmatprep.subr.mxu0 0.0
    %1090 = vmatpush1.msra.mxu0 0.0
    %1091 = vmatprep.subr.mxu0 0.0
    %1092 = vmatpush1.msra.mxu0 0.0
    %1093 = vmatprep.subr.mxu0 0.0
    %1094 = vmatpush1.msra.mxu0 0.0
    %1095 = vmatprep.subr.mxu0 0.0
    %1096 = vmatpush1.msra.mxu0 0.0
    %1097 = vmatprep.subr.mxu0 0.0
    %1098 = vmatpush1.msra.mxu0 0.0
    %1099 = vmatprep.subr.mxu0 0.0
    %1100 = vmatpush1.msra.mxu0 0.0
    %1101 = vmatprep.subr.mxu0 0.0
    %1102 = vmatpush1.msra.mxu0 0.0
    %1103 = vmatprep.subr.mxu0 0.0
    %1104 = vmatpush1.msra.mxu0 0.0
    %1105 = vmatprep.subr.mxu0 0.0
    %1106 = vmatpush1.msra.mxu0 0.0
    %1107 = vmatprep.subr.mxu0 0.0
    %1108 = vmatpush1.msra.mxu0 0.0
    %1109 = vmatprep.subr.mxu0 0.0
    %1110 = vmatpush1.msra.mxu0 0.0
    %1111 = vmatprep.subr.mxu0 0.0
    %1112 = vmatpush1.msra.mxu0 0.0
    %1113 = vmatprep.subr.mxu0 0.0
    %1114 = vmatpush1.msra.mxu0 0.0
    %1115 = vmatprep.subr.mxu0 0.0
    %1116 = vmatpush1.msra.mxu0 0.0
    %1117 = vmatprep.subr.mxu0 0.0
    %1118 = vmatpush1.msra.mxu0 0.0
    %1119 = vmatprep.subr.mxu0 0.0
    %1120 = vmatpush1.msra.mxu0 0.0
    %1121 = vmatprep.subr.mxu0 0.0
    %1122 = vmatpush1.msra.mxu0 0.0
    %1123 = vmatprep.mubr.f32.mxu0 0.0
    %1124 = vmatmul.mubr.f32.gmra.mrb[0].mxu0 %v1057
    %v1125 = vpop.f32.mrb[0].mxu0
    %v1126 = vadd.f32 0.0, %v1125
    %v1127 = vpop.f32.mrb[0].mxu0
    %1128 = vdwg.mxu0
    %1129 = vrot.lane.b32.xlu0 %v121, 64
    %v1130 = vpop.permute.xlu0 %1129
    %v1133 = vsel %vm130, %v818, 0
    %1135 = vmatprep.subr.mxu0 0.0
    %1136 = vmatpush1.msra.mxu0 %v1130
    %1137 = vmatprep.subr.mxu0 0.0
    %1138 = vmatpush1.msra.mxu0 0.0
    %1139 = vmatprep.subr.mxu0 0.0
    %1140 = vmatpush1.msra.mxu0 0.0
    %1141 = vmatprep.subr.mxu0 0.0
    %1142 = vmatpush1.msra.mxu0 0.0
    %1143 = vmatprep.subr.mxu0 0.0
    %1144 = vmatpush1.msra.mxu0 0.0
    %1145 = vmatprep.subr.mxu0 0.0
    %1146 = vmatpush1.msra.mxu0 0.0
    %1147 = vmatprep.subr.mxu0 0.0
    %1148 = vmatpush1.msra.mxu0 0.0
    %1149 = vmatprep.subr.mxu0 0.0
    %1150 = vmatpush1.msra.mxu0 0.0
    %1151 = vmatprep.subr.mxu0 0.0
    %1152 = vmatpush1.msra.mxu0 0.0
    %1153 = vmatprep.subr.mxu0 0.0
    %1154 = vmatpush1.msra.mxu0 0.0
    %1155 = vmatprep.subr.mxu0 0.0
    %1156 = vmatpush1.msra.mxu0 0.0
    %1157 = vmatprep.subr.mxu0 0.0
    %1158 = vmatpush1.msra.mxu0 0.0
    %1159 = vmatprep.subr.mxu0 0.0
    %1160 = vmatpush1.msra.mxu0 0.0
    %1161 = vmatprep.subr.mxu0 0.0
    %1162 = vmatpush1.msra.mxu0 0.0
    %1163 = vmatprep.subr.mxu0 0.0
    %1164 = vmatpush1.msra.mxu0 0.0
    %1165 = vmatprep.subr.mxu0 0.0
    %1166 = vmatpush1.msra.mxu0 0.0
    %1167 = vmatprep.subr.mxu0 0.0
    %1168 = vmatpush1.msra.mxu0 0.0
    %1169 = vmatprep.subr.mxu0 0.0
    %1170 = vmatpush1.msra.mxu0 0.0
    %1171 = vmatprep.subr.mxu0 0.0
    %1172 = vmatpush1.msra.mxu0 0.0
    %1173 = vmatprep.subr.mxu0 0.0
    %1174 = vmatpush1.msra.mxu0 0.0
    %1175 = vmatprep.subr.mxu0 0.0
    %1176 = vmatpush1.msra.mxu0 0.0
    %1177 = vmatprep.subr.mxu0 0.0
    %1178 = vmatpush1.msra.mxu0 0.0
    %1179 = vmatprep.subr.mxu0 0.0
    %1180 = vmatpush1.msra.mxu0 0.0
    %1181 = vmatprep.subr.mxu0 0.0
    %1182 = vmatpush1.msra.mxu0 0.0
    %1183 = vmatprep.subr.mxu0 0.0
    %1184 = vmatpush1.msra.mxu0 0.0
    %1185 = vmatprep.subr.mxu0 0.0
    %1186 = vmatpush1.msra.mxu0 0.0
    %1187 = vmatprep.subr.mxu0 0.0
    %1188 = vmatpush1.msra.mxu0 0.0
    %1189 = vmatprep.subr.mxu0 0.0
    %1190 = vmatpush1.msra.mxu0 0.0
    %1191 = vmatprep.subr.mxu0 0.0
    %1192 = vmatpush1.msra.mxu0 0.0
    %1193 = vmatprep.subr.mxu0 0.0
    %1194 = vmatpush1.msra.mxu0 0.0
    %1195 = vmatprep.subr.mxu0 0.0
    %1196 = vmatpush1.msra.mxu0 0.0
    %1197 = vmatprep.subr.mxu0 0.0
    %1198 = vmatpush1.msra.mxu0 0.0
    %1199 = vmatprep.mubr.f32.mxu0 0.0
    %1200 = vmatmul.mubr.f32.gmra.mrb[0].mxu0 %v1133
    %v1201 = vpop.f32.mrb[0].mxu0
    %v1202 = vadd.f32 0.0, %v1201
    %v1203 = vpop.f32.mrb[0].mxu0
    %1204 = vdwg.mxu0
    %1205 = vrot.lane.b32.xlu0 %v123, 64
    %v1206 = vpop.permute.xlu0 %1205
    %v1209 = vsel %vm130, %v820, 0
    %1211 = vmatprep.subr.mxu0 0.0
    %1212 = vmatpush1.msra.mxu0 %v1206
    %1213 = vmatprep.subr.mxu0 0.0
    %1214 = vmatpush1.msra.mxu0 0.0
    %1215 = vmatprep.subr.mxu0 0.0
    %1216 = vmatpush1.msra.mxu0 0.0
    %1217 = vmatprep.subr.mxu0 0.0
    %1218 = vmatpush1.msra.mxu0 0.0
    %1219 = vmatprep.subr.mxu0 0.0
    %1220 = vmatpush1.msra.mxu0 0.0
    %1221 = vmatprep.subr.mxu0 0.0
    %1222 = vmatpush1.msra.mxu0 0.0
    %1223 = vmatprep.subr.mxu0 0.0
    %1224 = vmatpush1.msra.mxu0 0.0
    %1225 = vmatprep.subr.mxu0 0.0
    %1226 = vmatpush1.msra.mxu0 0.0
    %1227 = vmatprep.subr.mxu0 0.0
    %1228 = vmatpush1.msra.mxu0 0.0
    %1229 = vmatprep.subr.mxu0 0.0
    %1230 = vmatpush1.msra.mxu0 0.0
    %1231 = vmatprep.subr.mxu0 0.0
    %1232 = vmatpush1.msra.mxu0 0.0
    %1233 = vmatprep.subr.mxu0 0.0
    %1234 = vmatpush1.msra.mxu0 0.0
    %1235 = vmatprep.subr.mxu0 0.0
    %1236 = vmatpush1.msra.mxu0 0.0
    %1237 = vmatprep.subr.mxu0 0.0
    %1238 = vmatpush1.msra.mxu0 0.0
    %1239 = vmatprep.subr.mxu0 0.0
    %1240 = vmatpush1.msra.mxu0 0.0
    %1241 = vmatprep.subr.mxu0 0.0
    %1242 = vmatpush1.msra.mxu0 0.0
    %1243 = vmatprep.subr.mxu0 0.0
    %1244 = vmatpush1.msra.mxu0 0.0
    %1245 = vmatprep.subr.mxu0 0.0
    %1246 = vmatpush1.msra.mxu0 0.0
    %1247 = vmatprep.subr.mxu0 0.0
    %1248 = vmatpush1.msra.mxu0 0.0
    %1249 = vmatprep.subr.mxu0 0.0
    %1250 = vmatpush1.msra.mxu0 0.0
    %1251 = vmatprep.subr.mxu0 0.0
    %1252 = vmatpush1.msra.mxu0 0.0
    %1253 = vmatprep.subr.mxu0 0.0
    %1254 = vmatpush1.msra.mxu0 0.0
    %1255 = vmatprep.subr.mxu0 0.0
    %1256 = vmatpush1.msra.mxu0 0.0
    %1257 = vmatprep.subr.mxu0 0.0
    %1258 = vmatpush1.msra.mxu0 0.0
    %1259 = vmatprep.subr.mxu0 0.0
    %1260 = vmatpush1.msra.mxu0 0.0
    %1261 = vmatprep.subr.mxu0 0.0
    %1262 = vmatpush1.msra.mxu0 0.0
    %1263 = vmatprep.subr.mxu0 0.0
    %1264 = vmatpush1.msra.mxu0 0.0
    %1265 = vmatprep.subr.mxu0 0.0
    %1266 = vmatpush1.msra.mxu0 0.0
    %1267 = vmatprep.subr.mxu0 0.0
    %1268 = vmatpush1.msra.mxu0 0.0
    %1269 = vmatprep.subr.mxu0 0.0
    %1270 = vmatpush1.msra.mxu0 0.0
    %1271 = vmatprep.subr.mxu0 0.0
    %1272 = vmatpush1.msra.mxu0 0.0
    %1273 = vmatprep.subr.mxu0 0.0
    %1274 = vmatpush1.msra.mxu0 0.0
    %1275 = vmatprep.mubr.f32.mxu0 0.0
    %1276 = vmatmul.mubr.f32.gmra.mrb[0].mxu0 %v1209
    %v1277 = vpop.f32.mrb[0].mxu0
    %v1278 = vadd.f32 0.0, %v1277
    %v1279 = vpop.f32.mrb[0].mxu0
    %1280 = vdwg.mxu0
    %1281 = vrot.lane.b32.xlu0 %v125, 64
    %v1282 = vpop.permute.xlu0 %1281
    %v1285 = vsel %vm130, %v822, 0
    %1287 = vmatprep.subr.mxu0 0.0
    %1288 = vmatpush1.msra.mxu0 %v1282
    %1289 = vmatprep.subr.mxu0 0.0
    %1290 = vmatpush1.msra.mxu0 0.0
    %1291 = vmatprep.subr.mxu0 0.0
    %1292 = vmatpush1.msra.mxu0 0.0
    %1293 = vmatprep.subr.mxu0 0.0
    %1294 = vmatpush1.msra.mxu0 0.0
    %1295 = vmatprep.subr.mxu0 0.0
    %1296 = vmatpush1.msra.mxu0 0.0
    %1297 = vmatprep.subr.mxu0 0.0
    %1298 = vmatpush1.msra.mxu0 0.0
    %1299 = vmatprep.subr.mxu0 0.0
    %1300 = vmatpush1.msra.mxu0 0.0
    %1301 = vmatprep.subr.mxu0 0.0
    %1302 = vmatpush1.msra.mxu0 0.0
    %1303 = vmatprep.subr.mxu0 0.0
    %1304 = vmatpush1.msra.mxu0 0.0
    %1305 = vmatprep.subr.mxu0 0.0
    %1306 = vmatpush1.msra.mxu0 0.0
    %1307 = vmatprep.subr.mxu0 0.0
    %1308 = vmatpush1.msra.mxu0 0.0
    %1309 = vmatprep.subr.mxu0 0.0
    %1310 = vmatpush1.msra.mxu0 0.0
    %1311 = vmatprep.subr.mxu0 0.0
    %1312 = vmatpush1.msra.mxu0 0.0
    %1313 = vmatprep.subr.mxu0 0.0
    %1314 = vmatpush1.msra.mxu0 0.0
    %1315 = vmatprep.subr.mxu0 0.0
    %1316 = vmatpush1.msra.mxu0 0.0
    %1317 = vmatprep.subr.mxu0 0.0
    %1318 = vmatpush1.msra.mxu0 0.0
    %1319 = vmatprep.subr.mxu0 0.0
    %1320 = vmatpush1.msra.mxu0 0.0
    %1321 = vmatprep.subr.mxu0 0.0
    %1322 = vmatpush1.msra.mxu0 0.0
    %1323 = vmatprep.subr.mxu0 0.0
    %1324 = vmatpush1.msra.mxu0 0.0
    %1325 = vmatprep.subr.mxu0 0.0
    %1326 = vmatpush1.msra.mxu0 0.0
    %1327 = vmatprep.subr.mxu0 0.0
    %1328 = vmatpush1.msra.mxu0 0.0
    %1329 = vmatprep.subr.mxu0 0.0
    %1330 = vmatpush1.msra.mxu0 0.0
    %1331 = vmatprep.subr.mxu0 0.0
    %1332 = vmatpush1.msra.mxu0 0.0
    %1333 = vmatprep.subr.mxu0 0.0
    %1334 = vmatpush1.msra.mxu0 0.0
    %1335 = vmatprep.subr.mxu0 0.0
    %1336 = vmatpush1.msra.mxu0 0.0
    %1337 = vmatprep.subr.mxu0 0.0
    %1338 = vmatpush1.msra.mxu0 0.0
    %1339 = vmatprep.subr.mxu0 0.0
    %1340 = vmatpush1.msra.mxu0 0.0
    %1341 = vmatprep.subr.mxu0 0.0
    %1342 = vmatpush1.msra.mxu0 0.0
    %1343 = vmatprep.subr.mxu0 0.0
    %1344 = vmatpush1.msra.mxu0 0.0
    %1345 = vmatprep.subr.mxu0 0.0
    %1346 = vmatpush1.msra.mxu0 0.0
    %1347 = vmatprep.subr.mxu0 0.0
    %1348 = vmatpush1.msra.mxu0 0.0
    %1349 = vmatprep.subr.mxu0 0.0
    %1350 = vmatpush1.msra.mxu0 0.0
    %1351 = vmatprep.mubr.f32.mxu0 0.0
    %1352 = vmatmul.mubr.f32.gmra.mrb[0].mxu0 %v1285
    %v1353 = vpop.f32.mrb[0].mxu0
    %v1354 = vadd.f32 0.0, %v1353
    %v1355 = vpop.f32.mrb[0].mxu0
    %1356 = vdwg.mxu0
    %1357 = vrot.lane.b32.xlu0 %v127, 64
    %v1358 = vpop.permute.xlu0 %1357
    %v1361 = vsel %vm130, %v824, 0
    %1363 = vmatprep.subr.mxu0 0.0
    %1364 = vmatpush1.msra.mxu0 %v1358
    %1365 = vmatprep.subr.mxu0 0.0
    %1366 = vmatpush1.msra.mxu0 0.0
    %1367 = vmatprep.subr.mxu0 0.0
    %1368 = vmatpush1.msra.mxu0 0.0
    %1369 = vmatprep.subr.mxu0 0.0
    %1370 = vmatpush1.msra.mxu0 0.0
    %1371 = vmatprep.subr.mxu0 0.0
    %1372 = vmatpush1.msra.mxu0 0.0
    %1373 = vmatprep.subr.mxu0 0.0
    %1374 = vmatpush1.msra.mxu0 0.0
    %1375 = vmatprep.subr.mxu0 0.0
    %1376 = vmatpush1.msra.mxu0 0.0
    %1377 = vmatprep.subr.mxu0 0.0
    %1378 = vmatpush1.msra.mxu0 0.0
    %1379 = vmatprep.subr.mxu0 0.0
    %1380 = vmatpush1.msra.mxu0 0.0
    %1381 = vmatprep.subr.mxu0 0.0
    %1382 = vmatpush1.msra.mxu0 0.0
    %1383 = vmatprep.subr.mxu0 0.0
    %1384 = vmatpush1.msra.mxu0 0.0
    %1385 = vmatprep.subr.mxu0 0.0
    %1386 = vmatpush1.msra.mxu0 0.0
    %1387 = vmatprep.subr.mxu0 0.0
    %1388 = vmatpush1.msra.mxu0 0.0
    %1389 = vmatprep.subr.mxu0 0.0
    %1390 = vmatpush1.msra.mxu0 0.0
    %1391 = vmatprep.subr.mxu0 0.0
    %1392 = vmatpush1.msra.mxu0 0.0
    %1393 = vmatprep.subr.mxu0 0.0
    %1394 = vmatpush1.msra.mxu0 0.0
    %1395 = vmatprep.subr.mxu0 0.0
    %1396 = vmatpush1.msra.mxu0 0.0
    %1397 = vmatprep.subr.mxu0 0.0
    %1398 = vmatpush1.msra.mxu0 0.0
    %1399 = vmatprep.subr.mxu0 0.0
    %1400 = vmatpush1.msra.mxu0 0.0
    %1401 = vmatprep.subr.mxu0 0.0
    %1402 = vmatpush1.msra.mxu0 0.0
    %1403 = vmatprep.subr.mxu0 0.0
    %1404 = vmatpush1.msra.mxu0 0.0
    %1405 = vmatprep.subr.mxu0 0.0
    %1406 = vmatpush1.msra.mxu0 0.0
    %1407 = vmatprep.subr.mxu0 0.0
    %1408 = vmatpush1.msra.mxu0 0.0
    %1409 = vmatprep.subr.mxu0 0.0
    %1410 = vmatpush1.msra.mxu0 0.0
    %1411 = vmatprep.subr.mxu0 0.0
    %1412 = vmatpush1.msra.mxu0 0.0
    %1413 = vmatprep.subr.mxu0 0.0
    %1414 = vmatpush1.msra.mxu0 0.0
    %1415 = vmatprep.subr.mxu0 0.0
    %1416 = vmatpush1.msra.mxu0 0.0
    %1417 = vmatprep.subr.mxu0 0.0
    %1418 = vmatpush1.msra.mxu0 0.0
    %1419 = vmatprep.subr.mxu0 0.0
    %1420 = vmatpush1.msra.mxu0 0.0
    %1421 = vmatprep.subr.mxu0 0.0
    %1422 = vmatpush1.msra.mxu0 0.0
    %1423 = vmatprep.subr.mxu0 0.0
    %1424 = vmatpush1.msra.mxu0 0.0
    %1425 = vmatprep.subr.mxu0 0.0
    %1426 = vmatpush1.msra.mxu0 0.0
    %1427 = vmatprep.mubr.f32.mxu0 0.0
    %1428 = vmatmul.mubr.f32.gmra.mrb[0].mxu0 %v1361
    %v1429 = vpop.f32.mrb[0].mxu0
    %v1430 = vadd.f32 0.0, %v1429
    %v1431 = vpop.f32.mrb[0].mxu0
    %1432 = vdwg.mxu0
    %1435 = vrot.lane.b32.xlu0 %v1050, 8
    %v1436 = vpop.permute.xlu0 %1435
    %1437 = vrot.lane.b32.xlu0 %v1126, 8
    %v1438 = vpop.permute.xlu0 %1437
    %1443 = vrot.lane.b32.xlu0 %v1202, 16
    %v1444 = vpop.permute.xlu0 %1443
    %1445 = vrot.lane.b32.xlu0 %v1278, 16
    %v1446 = vpop.permute.xlu0 %1445
    %1451 = vrot.lane.b32.xlu0 %v1354, 24
    %v1452 = vpop.permute.xlu0 %1451
    %1453 = vrot.lane.b32.xlu0 %v1430, 24
    %v1454 = vpop.permute.xlu0 %1453
    %v1457 = vsel %vm130, %v898, %v1436
    %v1458 = vsel %vm130, %v974, %v1438
    %vm1459 = vcmask 130048
    %v1460 = vsel %vm1459, %v1457, %v1444
    %v1461 = vsel %vm1459, %v1458, %v1446
    %vm1462 = vcmask 195584
    %v1463 = vsel %vm1462, %v1460, %v1452
    %v1464 = vsel %vm1462, %v1461, %v1454
    %v1465 = vlaneseq
    %v1466 = vshrl.u32 %v1465, 7
    %v1467 = vsub.s32 0, %v1466
    %v1468 = vrot.slane %v21, %v1467
    %vm1469 = vcmask 261120
    %v1471 = vsel %vm1469, %v1463, 0
    %v1474 = vsel %vm1469, %v1464, 0
    %1476 = vmatprep.subr.mxu0 0.0
    %1477 = vmatpush1.msra.mxu0 %v17
    %1478 = vmatprep.subr.mxu0 0.0
    %1479 = vmatpush1.msra.mxu0 %v18
    %1480 = vmatprep.subr.mxu0 0.0
    %1481 = vmatpush1.msra.mxu0 %v19
    %1482 = vmatprep.subr.mxu0 0.0
    %1483 = vmatpush1.msra.mxu0 %v20
    %1484 = vmatprep.subr.mxu0 0.0
    %1485 = vmatpush1.msra.mxu0 0.0
    %1486 = vmatprep.subr.mxu0 0.0
    %1487 = vmatpush1.msra.mxu0 0.0
    %1488 = vmatprep.subr.mxu0 0.0
    %1489 = vmatpush1.msra.mxu0 0.0
    %1490 = vmatprep.subr.mxu0 0.0
    %1491 = vmatpush1.msra.mxu0 0.0
    %1492 = vmatprep.subr.mxu0 0.0
    %1493 = vmatpush1.msra.mxu0 0.0
    %1494 = vmatprep.subr.mxu0 0.0
    %1495 = vmatpush1.msra.mxu0 0.0
    %1496 = vmatprep.subr.mxu0 0.0
    %1497 = vmatpush1.msra.mxu0 0.0
    %1498 = vmatprep.subr.mxu0 0.0
    %1499 = vmatpush1.msra.mxu0 0.0
    %1500 = vmatprep.subr.mxu0 0.0
    %1501 = vmatpush1.msra.mxu0 0.0
    %1502 = vmatprep.subr.mxu0 0.0
    %1503 = vmatpush1.msra.mxu0 0.0
    %1504 = vmatprep.subr.mxu0 0.0
    %1505 = vmatpush1.msra.mxu0 0.0
    %1506 = vmatprep.subr.mxu0 0.0
    %1507 = vmatpush1.msra.mxu0 0.0
    %1508 = vmatprep.subr.mxu0 0.0
    %1509 = vmatpush1.msra.mxu0 0.0
    %1510 = vmatprep.subr.mxu0 0.0
    %1511 = vmatpush1.msra.mxu0 0.0
    %1512 = vmatprep.subr.mxu0 0.0
    %1513 = vmatpush1.msra.mxu0 0.0
    %1514 = vmatprep.subr.mxu0 0.0
    %1515 = vmatpush1.msra.mxu0 0.0
    %1516 = vmatprep.subr.mxu0 0.0
    %1517 = vmatpush1.msra.mxu0 0.0
    %1518 = vmatprep.subr.mxu0 0.0
    %1519 = vmatpush1.msra.mxu0 0.0
    %1520 = vmatprep.subr.mxu0 0.0
    %1521 = vmatpush1.msra.mxu0 0.0
    %1522 = vmatprep.subr.mxu0 0.0
    %1523 = vmatpush1.msra.mxu0 0.0
    %1524 = vmatprep.subr.mxu0 0.0
    %1525 = vmatpush1.msra.mxu0 0.0
    %1526 = vmatprep.subr.mxu0 0.0
    %1527 = vmatpush1.msra.mxu0 0.0
    %1528 = vmatprep.subr.mxu0 0.0
    %1529 = vmatpush1.msra.mxu0 0.0
    %1530 = vmatprep.subr.mxu0 0.0
    %1531 = vmatpush1.msra.mxu0 0.0
    %1532 = vmatprep.subr.mxu0 0.0
    %1533 = vmatpush1.msra.mxu0 0.0
    %1534 = vmatprep.subr.mxu0 0.0
    %1535 = vmatpush1.msra.mxu0 0.0
    %1536 = vmatprep.subr.mxu0 0.0
    %1537 = vmatpush1.msra.mxu0 0.0
    %1538 = vmatprep.subr.mxu0 0.0
    %1539 = vmatpush1.msra.mxu0 0.0
    %1540 = vmatprep.mubr.f32.mxu0 0.0
    %1541 = vmatmul.mubr.f32.gmra.mrb[0].mxu0 %v1471
    %v1542 = vpop.f32.mrb[0].mxu0
    %v1543 = vadd.f32 %v1468, %v1542
    %v1544 = vpop.f32.mrb[0].mxu0
    %1545 = vmatprep.mubr.f32.mxu0 0.0
    %1546 = vmatmul.mubr.f32.gmra.mrb[0].mxu0 %v1474
    %v1547 = vpop.f32.mrb[0].mxu0
    %v1548 = vadd.f32 %v1468, %v1547
    %v1549 = vpop.f32.mrb[0].mxu0
    %1550 = vdwg.mxu0
    %1551 = vst.msk [vmem:[#allocation2] sm:$0xff] %vm1469, %v1543
    %1552 = vst.msk [vmem:[#allocation2 + $0x8] sm:$0xff] %vm1469, %v1548
    // Predicated region
    $region10: #{multi_head_attention.1} parent=1 // pred_check
      _
    $region11: #{multi_head_attention.1} parent=1 // pred_check_branch
      %1554 = sbr.rel (0) target = $region13
    $region12: #{multi_head_attention.1} parent=1 // pred_region
      %s1556 = ssub.s32 256, 256
      %1557 = vsyncadd [#allocation3], %s1556
      %s1558 = sshll.u32 [#allocation2], 4
      %s1559 = int_to_ptr.vmem [resolvable:$true] %s1558
      %1564 = dma.vmem_to_hbm [thread:$0]  %s1559, 256, %s2, [#allocation3], 128, 128, 8
    $region13: #{multi_head_attention.1} parent=1 // pred_fallthru
      _
    // Predicated region
    $region14: #{multi_head_attention.1} parent=1 // pred_check
      _
    $region15: #{multi_head_attention.1} parent=1 // pred_check_branch
      %1566 = sbr.rel (0) target = $region17
    $region16: #{multi_head_attention.1} parent=1 // pred_region
      %1567 = dma.done [#allocation3], 256
    $region17: #{multi_head_attention.1} parent=1 // pred_fallthru
      _
    %1568 = vsyncpa [#allocation3], 1

</llo_original>
